<compile_context>
chip_gen: v6e
topology: v6e:2x2x1
jax: 0.10.0
libtpu: 0.0.40
codegen_flags: <defaults>
</compile_context>

<pallas_src>
import math

import numpy as np

import jax
import jax.numpy as jnp
from jax import lax
from jax.experimental import pallas as pl
from jax.experimental.pallas import tpu as pltpu

INPUT_DIM = 8
HIDDEN_DIM = 4          # must be 4 (see note above)
SEQ_LEN = 10            # must be >= TRAIN_OUT (torch code reads att_output[0][l], l<10)
TRAIN_IN = 10
TRAIN_OUT = 10


def attention_kernel(x_ref, h0_ref, c0_ref, wihT_ref, whhT_ref, b_ref, enc_ref,
                     out_ref):
    H = HIDDEN_DIM

    # ---- LSTM input projection hoisted out of the recurrence (single MXU op) ----
    xw = (jnp.dot(x_ref[...], wihT_ref[...], preferred_element_type=jnp.float32)
          + b_ref[...])                                              # (T, 4H)

    # recurrent weight rows (loop-invariant slices, hoisted)
    whhT = whhT_ref[...]                                             # (H, 4H)
    w0 = whhT[0:1, :]
    w1 = whhT[1:2, :]
    w2 = whhT[2:3, :]
    w3 = whhT[3:4, :]

    h = h0_ref[...]                                                  # (1, H)
    c = c0_ref[...]                                                  # (1, H)

    # ---- recurrence: VPU-only (no per-step matmul), 1 sigmoid + 1 tanh / step ----
    # The g-gate columns of wihT/whhT/b are pre-scaled by 2 (prepare_params), so
    # 2*sigmoid(gates[2H:3H]) - 1 == tanh of the original g-gate preactivation.
    for t in range(SEQ_LEN):
        rec = ((h[:, 0:1] * w0 + h[:, 1:2] * w1)
               + (h[:, 2:3] * w2 + h[:, 3:4] * w3))                  # (1, 4H) tree-reduced
        gates = xw[t:t + 1, :] + rec                                 # (1, 4H)
        sig = jax.nn.sigmoid(gates)                                  # one EUP pass
        i_g = sig[:, 0 * H:1 * H]
        f_g = sig[:, 1 * H:2 * H]
        g_g = 2.0 * sig[:, 2 * H:3 * H] - 1.0                        # == tanh(g preact)
        o_g = sig[:, 3 * H:4 * H]
        c = f_g * c + i_g * g_g
        h = o_g * jnp.tanh(c)
        if t < TRAIN_OUT:
            out_ref[t:t + 1, H:2 * H] = h                            # store row directly

    A = out_ref[:, H:2 * H]                                          # (TRAIN_OUT, H) readback
    E = enc_ref[...]                                                 # (TRAIN_IN, H)

    # ---- attention scores S[l, k] = att[l] . enc[k]  (same layout as torch `weight`) ----
    S = lax.dot_general(A, E, (((1,), (1,)), ((), ())),
                        preferred_element_type=jnp.float32)          # (TRAIN_OUT, TRAIN_IN)

    # Faithful to the torch bug: only weight[l][TRAIN_IN-1] is "normalized",
    # divided by the row sum TRAIN_IN times.  Work in log space so the
    # compounding product below becomes a prefix sum.  Built in registers with
    # a lane mask (no VMEM round-trip).
    row_sum = jnp.sum(jnp.exp(S), axis=1, keepdims=True)             # (TRAIN_OUT, 1)
    col = lax.broadcasted_iota(jnp.int32, (TRAIN_OUT, TRAIN_IN), 1)
    log_w = jnp.where(col == TRAIN_IN - 1,
                      S - TRAIN_IN * jnp.log(row_sum), S)            # (TRAIN_OUT, TRAIN_IN)

    # ---- cn: compounding in-place scaling of encoder_output ----
    # cn[l] = sum_k E[k] * prod_{m<=l} weight[m][k]; the prefix product is a
    # log-space prefix sum -> one lower-triangular matmul + exp + one matmul
    # instead of a 10-deep serial multiply/reduce chain.
    r_idx = lax.broadcasted_iota(jnp.int32, (TRAIN_OUT, TRAIN_OUT), 0)
    c_idx = lax.broadcasted_iota(jnp.int32, (TRAIN_OUT, TRAIN_OUT), 1)
    lower_tri = (c_idx <= r_idx).astype(jnp.float32)                 # (TRAIN_OUT, TRAIN_OUT)
    cum_log = jnp.dot(lower_tri, log_w, preferred_element_type=jnp.float32)
    cum_w = jnp.exp(cum_log)                                         # prod_{m<=l} weight[m][k]
    cn = jnp.dot(cum_w, E, preferred_element_type=jnp.float32)       # (TRAIN_OUT, H)

    out_ref[:, 0:H] = cn                                             # att rows already stored


def prepare_params(wih, whh, bih, bhh):
    """One-time repack of torch-layout LSTM params (done OUTSIDE the jitted forward).

    The g-gate (cell-candidate) columns are pre-scaled by 2 so the kernel can
    use tanh(x) = 2*sigmoid(2x) - 1 inside its single full-width sigmoid.
    """
    H = HIDDEN_DIM
    wihT = jnp.asarray(wih, jnp.float32).T                           # (D, 4H)
    whhT = jnp.asarray(whh, jnp.float32).T                           # (H, 4H)
    b = (jnp.asarray(bih, jnp.float32)
         + jnp.asarray(bhh, jnp.float32)).reshape(1, -1)             # (1, 4H)
    scale = jnp.ones((1, 4 * H), jnp.float32).at[:, 2 * H:3 * H].set(2.0)
    return wihT * scale, whhT * scale, b * scale


@jax.jit
def attention_forward(inputs, h0, c0, encoder_output, wihT, whhT, b):
    """Batched forward: B independent samples, each with the module's batch=1 semantics.

    inputs: (B, T, D); h0/c0: (B, 1, H); encoder_output: (B, TRAIN_IN, H).
    Returns (B, TRAIN_OUT, 2H).
    """
    B = inputs.shape[0]
    H = HIDDEN_DIM

    # Tiny per-sample flop/byte counts — just a hint so XLA overlaps this call.
    flops = B * (2 * SEQ_LEN * (INPUT_DIM + HIDDEN_DIM) * 4 * HIDDEN_DIM
                 + 2 * TRAIN_OUT * TRAIN_IN * HIDDEN_DIM
                 + 2 * TRAIN_OUT * TRAIN_OUT * TRAIN_IN
                 + 2 * TRAIN_OUT * TRAIN_IN * HIDDEN_DIM)
    transcendentals = B * (SEQ_LEN * (4 * HIDDEN_DIM + HIDDEN_DIM)
                           + 2 * TRAIN_OUT * TRAIN_IN + TRAIN_OUT)
    bytes_accessed = 4 * (B * (SEQ_LEN * INPUT_DIM + 2 * HIDDEN_DIM
                               + TRAIN_IN * HIDDEN_DIM
                               + TRAIN_OUT * 2 * HIDDEN_DIM)
                          + (INPUT_DIM + HIDDEN_DIM + 1) * 4 * HIDDEN_DIM)

    out = pl.pallas_call(
        attention_kernel,
        out_shape=jax.ShapeDtypeStruct((B, TRAIN_OUT, 2 * HIDDEN_DIM), jnp.float32),
        grid=(B,),
        in_specs=[
            pl.BlockSpec((None, SEQ_LEN, INPUT_DIM), lambda i: (i, 0, 0)),      # x
            pl.BlockSpec((None, 1, HIDDEN_DIM), lambda i: (i, 0, 0)),           # h0
            pl.BlockSpec((None, 1, HIDDEN_DIM), lambda i: (i, 0, 0)),           # c0
            pl.BlockSpec((INPUT_DIM, 4 * HIDDEN_DIM), lambda i: (0, 0)),        # wihT (shared)
            pl.BlockSpec((HIDDEN_DIM, 4 * HIDDEN_DIM), lambda i: (0, 0)),       # whhT (shared)
            pl.BlockSpec((1, 4 * HIDDEN_DIM), lambda i: (0, 0)),                # bias (shared)
            pl.BlockSpec((None, TRAIN_IN, HIDDEN_DIM), lambda i: (i, 0, 0)),    # enc
        ],
        out_specs=pl.BlockSpec((None, TRAIN_OUT, 2 * HIDDEN_DIM), lambda i: (i, 0, 0)),
        compiler_params=pltpu.CompilerParams(
            dimension_semantics=("parallel",)),        # both TCs on v7x; harmless on v5e/v6e
        cost_estimate=pl.CostEstimate(flops=flops,
                                      transcendentals=transcendentals,
                                      bytes_accessed=bytes_accessed),
    )(inputs, h0, c0, wihT, whhT, b, encoder_output)
    return out                      # (B, TRAIN_OUT, 2H)


# ---------------- pure-numpy reference mirroring the torch code ----------------
def _sigmoid(x):
    return 1.0 / (1.0 + np.exp(-x))


def reference_forward(inputs, h0, c0, encoder_output, wih, whh, bih, bhh):
    H = HIDDEN_DIM
    x = np.asarray(inputs, np.float32)[0]
    h = np.asarray(h0, np.float32)[0]
    c = np.asarray(c0, np.float32)[0]
    E = np.array(encoder_output, np.float32)[0].copy()   # mutated in place below
    wih = np.asarray(wih, np.float32)
    whh = np.asarray(whh, np.float32)
    bih = np.asarray(bih, np.float32)
    bhh = np.asarray(bhh, np.float32)

    att = []
    for t in range(x.shape[0]):
        g = x[t:t + 1] @ wih.T + h @ whh.T + bih + bhh
        i = _sigmoid(g[:, 0 * H:1 * H])
        f = _sigmoid(g[:, 1 * H:2 * H])
        gg = np.tanh(g[:, 2 * H:3 * H])
        o = _sigmoid(g[:, 3 * H:4 * H])
        c = f * c + i * gg
        h = o * np.tanh(c)
        att.append(h[0].copy())
    att = np.stack(att)

    W = np.array([[1.0] * TRAIN_IN] * TRAIN_OUT)
    for l in range(TRAIN_OUT):
        s = 0.0
        for k in range(TRAIN_IN):
            kt = math.exp(float(np.dot(att[l], E[k])))
            W[l][k] = kt
            s += kt
        for _w in range(TRAIN_IN):
            W[l][k] = W[l][k] / s      # stale k, same as torch code

    cn = []
    for l in range(TRAIN_OUT):
        cs = np.zeros(H, np.float32)
        for k in range(TRAIN_IN):
            E[k] = (np.float32(W[l][k]) * E[k]).astype(np.float32)
            cs = cs + E[k]
        cn.append(cs)

    out = np.stack([np.concatenate([cn[cc], att[cc]]) for cc in range(TRAIN_OUT)])
    return out[None].astype(np.float32)


if __name__ == "__main__":
    B = 2   # independent samples, each processed with the module's batch=1 semantics
    key = jax.random.PRNGKey(0)
    k1, k2, k3, k4, k5, k6, k7, k8 = jax.random.split(key, 8)

    # deterministic LSTM parameters (PyTorch default-style uniform init), shared across B
    bound = 1.0 / math.sqrt(HIDDEN_DIM)
    wih = jax.random.uniform(k1, (4 * HIDDEN_DIM, INPUT_DIM), jnp.float32, -bound, bound)
    whh = jax.random.uniform(k2, (4 * HIDDEN_DIM, HIDDEN_DIM), jnp.float32, -bound, bound)
    bih = jax.random.uniform(k3, (4 * HIDDEN_DIM,), jnp.float32, -bound, bound)
    bhh = jax.random.uniform(k4, (4 * HIDDEN_DIM,), jnp.float32, -bound, bound)

    # inputs consistent with the torch forward: per sample seq=10, feature dims above
    inputs = 0.5 * jax.random.normal(k5, (B, SEQ_LEN, INPUT_DIM), jnp.float32)
    h0 = 0.1 * jax.random.normal(k6, (B, 1, HIDDEN_DIM), jnp.float32)
    c0 = 0.1 * jax.random.normal(k7, (B, 1, HIDDEN_DIM), jnp.float32)
    encoder_output = 0.5 * jax.random.normal(k8, (B, TRAIN_IN, HIDDEN_DIM), jnp.float32)

    # one-time parameter repack outside the jitted forward (no per-call transposes)
    wihT, whhT, b = prepare_params(wih, whh, bih, bhh)

    out = attention_forward(inputs, h0, c0, encoder_output, wihT, whhT, b)
    out = jax.block_until_ready(out)
    out_np = np.asarray(out)

    assert out_np.shape == (B, TRAIN_OUT, 2 * HIDDEN_DIM), out_np.shape
    for s in range(B):
        ref = reference_forward(np.asarray(inputs[s:s + 1]), np.asarray(h0[s:s + 1]),
                                np.asarray(c0[s:s + 1]), np.asarray(encoder_output[s:s + 1]),
                                np.asarray(wih), np.asarray(whh),
                                np.asarray(bih), np.asarray(bhh))
        np.testing.assert_allclose(out_np[s:s + 1], ref, rtol=5e-2, atol=1e-4)
    print("KERNEL_OK")
</pallas_src>

<mosaic_0001>
module attributes {stable_mosaic.version = 11 : i64} {
  func.func @attention_kernel(%arg0: i32, %arg1: memref<1x10x8xf32, #tpu.memory_space<vmem>>, %arg2: memref<1x1x4xf32, #tpu.memory_space<vmem>>, %arg3: memref<1x1x4xf32, #tpu.memory_space<vmem>>, %arg4: memref<8x16xf32, #tpu.memory_space<vmem>>, %arg5: memref<4x16xf32, #tpu.memory_space<vmem>>, %arg6: memref<1x16xf32, #tpu.memory_space<vmem>>, %arg7: memref<1x10x4xf32, #tpu.memory_space<vmem>>, %arg8: memref<1x10x8xf32, #tpu.memory_space<vmem>>) attributes {dimension_semantics = [#tpu.dimension_semantics<parallel>], iteration_bounds = array<i64: 2>, scalar_prefetch = 0 : i64, scratch_operands = 0 : i64, tpu.core_type = #tpu.core_type<tc>, window_params = [{transform_indices = @transform_0, window_bounds = array<i64: 1, 10, 8>}, {transform_indices = @transform_1, window_bounds = array<i64: 1, 1, 4>}, {transform_indices = @transform_2, window_bounds = array<i64: 1, 1, 4>}, {pipeline_mode = #tpu.pipeline_mode<synchronous>, transform_indices = @transform_3, window_bounds = array<i64: 8, 16>}, {pipeline_mode = #tpu.pipeline_mode<synchronous>, transform_indices = @transform_4, window_bounds = array<i64: 4, 16>}, {pipeline_mode = #tpu.pipeline_mode<synchronous>, transform_indices = @transform_5, window_bounds = array<i64: 1, 16>}, {transform_indices = @transform_6, window_bounds = array<i64: 1, 10, 4>}, {transform_indices = @transform_7, window_bounds = array<i64: 1, 10, 8>}]} {
    %c0 = arith.constant 0 : index
    %c0_0 = arith.constant 0 : index
    %c0_1 = arith.constant 0 : index
    %0 = vector.load %arg1[%c0, %c0_0, %c0_1] : memref<1x10x8xf32, #tpu.memory_space<vmem>>, vector<1x10x8xf32>
    %1 = vector.shape_cast %0 : vector<1x10x8xf32> to vector<10x8xf32>
    %c0_2 = arith.constant 0 : index
    %c0_3 = arith.constant 0 : index
    %2 = vector.load %arg4[%c0_2, %c0_3] : memref<8x16xf32, #tpu.memory_space<vmem>>, vector<8x16xf32>
    %cst = arith.constant dense<0.000000e+00> : vector<10x16xf32>
    %3 = tpu.matmul %1, %2, %cst {dimension_numbers = #tpu.dot_dimension_numbers<[1], [0], [0], [1], [0, 0, 1, 1], [], []>} : vector<10x8xf32>, vector<8x16xf32>, vector<10x16xf32> -> vector<10x16xf32>
    %c0_4 = arith.constant 0 : index
    %c0_5 = arith.constant 0 : index
    %4 = vector.load %arg6[%c0_4, %c0_5] : memref<1x16xf32, #tpu.memory_space<vmem>>, vector<1x16xf32>
    %5 = vector.broadcast %4 : vector<1x16xf32> to vector<10x16xf32>
    %6 = arith.addf %3, %5 : vector<10x16xf32>
    %c0_6 = arith.constant 0 : index
    %c0_7 = arith.constant 0 : index
    %7 = vector.load %arg5[%c0_6, %c0_7] : memref<4x16xf32, #tpu.memory_space<vmem>>, vector<4x16xf32>
    %8 = vector.extract_strided_slice %7 {offsets = [0, 0], sizes = [1, 16], strides = [1, 1]} : vector<4x16xf32> to vector<1x16xf32>
    %9 = vector.extract_strided_slice %7 {offsets = [1, 0], sizes = [1, 16], strides = [1, 1]} : vector<4x16xf32> to vector<1x16xf32>
    %10 = vector.extract_strided_slice %7 {offsets = [2, 0], sizes = [1, 16], strides = [1, 1]} : vector<4x16xf32> to vector<1x16xf32>
    %11 = vector.extract_strided_slice %7 {offsets = [3, 0], sizes = [1, 16], strides = [1, 1]} : vector<4x16xf32> to vector<1x16xf32>
    %c0_8 = arith.constant 0 : index
    %c0_9 = arith.constant 0 : index
    %c0_10 = arith.constant 0 : index
    %12 = vector.load %arg2[%c0_8, %c0_9, %c0_10] : memref<1x1x4xf32, #tpu.memory_space<vmem>>, vector<1x1x4xf32>
    %13 = vector.shape_cast %12 : vector<1x1x4xf32> to vector<1x4xf32>
    %c0_11 = arith.constant 0 : index
    %c0_12 = arith.constant 0 : index
    %c0_13 = arith.constant 0 : index
    %14 = vector.load %arg3[%c0_11, %c0_12, %c0_13] : memref<1x1x4xf32, #tpu.memory_space<vmem>>, vector<1x1x4xf32>
    %15 = vector.shape_cast %14 : vector<1x1x4xf32> to vector<1x4xf32>
    %16 = vector.extract_strided_slice %13 {offsets = [0, 0], sizes = [1, 1], strides = [1, 1]} : vector<1x4xf32> to vector<1x1xf32>
    %17 = vector.broadcast %16 : vector<1x1xf32> to vector<1x16xf32>
    %18 = arith.mulf %17, %8 : vector<1x16xf32>
    %19 = vector.extract_strided_slice %13 {offsets = [0, 1], sizes = [1, 1], strides = [1, 1]} : vector<1x4xf32> to vector<1x1xf32>
    %20 = vector.broadcast %19 : vector<1x1xf32> to vector<1x16xf32>
    %21 = arith.mulf %20, %9 : vector<1x16xf32>
    %22 = arith.addf %18, %21 : vector<1x16xf32>
    %23 = vector.extract_strided_slice %13 {offsets = [0, 2], sizes = [1, 1], strides = [1, 1]} : vector<1x4xf32> to vector<1x1xf32>
    %24 = vector.broadcast %23 : vector<1x1xf32> to vector<1x16xf32>
    %25 = arith.mulf %24, %10 : vector<1x16xf32>
    %26 = vector.extract_strided_slice %13 {offsets = [0, 3], sizes = [1, 1], strides = [1, 1]} : vector<1x4xf32> to vector<1x1xf32>
    %27 = vector.broadcast %26 : vector<1x1xf32> to vector<1x16xf32>
    %28 = arith.mulf %27, %11 : vector<1x16xf32>
    %29 = arith.addf %25, %28 : vector<1x16xf32>
    %30 = arith.addf %22, %29 : vector<1x16xf32>
    %31 = vector.extract_strided_slice %6 {offsets = [0, 0], sizes = [1, 16], strides = [1, 1]} : vector<10x16xf32> to vector<1x16xf32>
    %32 = arith.addf %31, %30 : vector<1x16xf32>
    %33 = arith.negf %32 : vector<1x16xf32>
    %34 = math.exp %33 : vector<1x16xf32>
    %cst_14 = arith.constant 1.000000e+00 : f32
    %35 = vector.broadcast %cst_14 : f32 to vector<1x16xf32>
    %36 = arith.addf %35, %34 : vector<1x16xf32>
    %37 = arith.divf %35, %36 : vector<1x16xf32>
    %38 = vector.extract_strided_slice %37 {offsets = [0, 0], sizes = [1, 4], strides = [1, 1]} : vector<1x16xf32> to vector<1x4xf32>
    %39 = vector.extract_strided_slice %37 {offsets = [0, 4], sizes = [1, 4], strides = [1, 1]} : vector<1x16xf32> to vector<1x4xf32>
    %40 = vector.extract_strided_slice %37 {offsets = [0, 8], sizes = [1, 4], strides = [1, 1]} : vector<1x16xf32> to vector<1x4xf32>
    %cst_15 = arith.constant 2.000000e+00 : f32
    %41 = vector.broadcast %cst_15 : f32 to vector<1x4xf32>
    %42 = arith.mulf %41, %40 : vector<1x4xf32>
    %cst_16 = arith.constant 1.000000e+00 : f32
    %43 = vector.broadcast %cst_16 : f32 to vector<1x4xf32>
    %44 = arith.subf %42, %43 : vector<1x4xf32>
    %45 = vector.extract_strided_slice %37 {offsets = [0, 12], sizes = [1, 4], strides = [1, 1]} : vector<1x16xf32> to vector<1x4xf32>
    %46 = arith.mulf %39, %15 : vector<1x4xf32>
    %47 = arith.mulf %38, %44 : vector<1x4xf32>
    %48 = arith.addf %46, %47 : vector<1x4xf32>
    %49 = math.tanh %48 : vector<1x4xf32>
    %50 = arith.mulf %45, %49 : vector<1x4xf32>
    %c0_17 = arith.constant 0 : index
    %c0_18 = arith.constant 0 : index
    %c4 = arith.constant 4 : index
    %51 = vector.load %arg8[%c0_17, %c0_18, %c4] : memref<1x10x8xf32, #tpu.memory_space<vmem>>, vector<1x1x4xf32>
    %52 = vector.shape_cast %51 : vector<1x1x4xf32> to vector<1x4xf32>
    %53 = vector.shape_cast %50 : vector<1x4xf32> to vector<1x1x4xf32>
    tpu.vector_store %arg8[%c0_17, %c0_18, %c4], %53 {strides = array<i32>} : memref<1x10x8xf32, #tpu.memory_space<vmem>>, vector<1x1x4xf32>,
    %54 = vector.extract_strided_slice %50 {offsets = [0, 0], sizes = [1, 1], strides = [1, 1]} : vector<1x4xf32> to vector<1x1xf32>
    %55 = vector.broadcast %54 : vector<1x1xf32> to vector<1x16xf32>
    %56 = arith.mulf %55, %8 : vector<1x16xf32>
    %57 = vector.extract_strided_slice %50 {offsets = [0, 1], sizes = [1, 1], strides = [1, 1]} : vector<1x4xf32> to vector<1x1xf32>
    %58 = vector.broadcast %57 : vector<1x1xf32> to vector<1x16xf32>
    %59 = arith.mulf %58, %9 : vector<1x16xf32>
    %60 = arith.addf %56, %59 : vector<1x16xf32>
    %61 = vector.extract_strided_slice %50 {offsets = [0, 2], sizes = [1, 1], strides = [1, 1]} : vector<1x4xf32> to vector<1x1xf32>
    %62 = vector.broadcast %61 : vector<1x1xf32> to vector<1x16xf32>
    %63 = arith.mulf %62, %10 : vector<1x16xf32>
    %64 = vector.extract_strided_slice %50 {offsets = [0, 3], sizes = [1, 1], strides = [1, 1]} : vector<1x4xf32> to vector<1x1xf32>
    %65 = vector.broadcast %64 : vector<1x1xf32> to vector<1x16xf32>
    %66 = arith.mulf %65, %11 : vector<1x16xf32>
    %67 = arith.addf %63, %66 : vector<1x16xf32>
    %68 = arith.addf %60, %67 : vector<1x16xf32>
    %69 = vector.extract_strided_slice %6 {offsets = [1, 0], sizes = [1, 16], strides = [1, 1]} : vector<10x16xf32> to vector<1x16xf32>
    %70 = arith.addf %69, %68 : vector<1x16xf32>
    %71 = arith.negf %70 : vector<1x16xf32>
    %72 = math.exp %71 : vector<1x16xf32>
    %cst_19 = arith.constant 1.000000e+00 : f32
    %73 = vector.broadcast %cst_19 : f32 to vector<1x16xf32>
    %74 = arith.addf %73, %72 : vector<1x16xf32>
    %75 = arith.divf %73, %74 : vector<1x16xf32>
    %76 = vector.extract_strided_slice %75 {offsets = [0, 0], sizes = [1, 4], strides = [1, 1]} : vector<1x16xf32> to vector<1x4xf32>
    %77 = vector.extract_strided_slice %75 {offsets = [0, 4], sizes = [1, 4], strides = [1, 1]} : vector<1x16xf32> to vector<1x4xf32>
    %78 = vector.extract_strided_slice %75 {offsets = [0, 8], sizes = [1, 4], strides = [1, 1]} : vector<1x16xf32> to vector<1x4xf32>
    %cst_20 = arith.constant 2.000000e+00 : f32
    %79 = vector.broadcast %cst_20 : f32 to vector<1x4xf32>
    %80 = arith.mulf %79, %78 : vector<1x4xf32>
    %cst_21 = arith.constant 1.000000e+00 : f32
    %81 = vector.broadcast %cst_21 : f32 to vector<1x4xf32>
    %82 = arith.subf %80, %81 : vector<1x4xf32>
    %83 = vector.extract_strided_slice %75 {offsets = [0, 12], sizes = [1, 4], strides = [1, 1]} : vector<1x16xf32> to vector<1x4xf32>
    %84 = arith.mulf %77, %48 : vector<1x4xf32>
    %85 = arith.mulf %76, %82 : vector<1x4xf32>
    %86 = arith.addf %84, %85 : vector<1x4xf32>
    %87 = math.tanh %86 : vector<1x4xf32>
    %88 = arith.mulf %83, %87 : vector<1x4xf32>
    %c0_22 = arith.constant 0 : index
    %c1 = arith.constant 1 : index
    %c4_23 = arith.constant 4 : index
    %89 = vector.load %arg8[%c0_22, %c1, %c4_23] : memref<1x10x8xf32, #tpu.memory_space<vmem>>, vector<1x1x4xf32>
    %90 = vector.shape_cast %89 : vector<1x1x4xf32> to vector<1x4xf32>
    %91 = vector.shape_cast %88 : vector<1x4xf32> to vector<1x1x4xf32>
    tpu.vector_store %arg8[%c0_22, %c1, %c4_23], %91 {strides = array<i32>} : memref<1x10x8xf32, #tpu.memory_space<vmem>>, vector<1x1x4xf32>,
    %92 = vector.extract_strided_slice %88 {offsets = [0, 0], sizes = [1, 1], strides = [1, 1]} : vector<1x4xf32> to vector<1x1xf32>
    %93 = vector.broadcast %92 : vector<1x1xf32> to vector<1x16xf32>
    %94 = arith.mulf %93, %8 : vector<1x16xf32>
    %95 = vector.extract_strided_slice %88 {offsets = [0, 1], sizes = [1, 1], strides = [1, 1]} : vector<1x4xf32> to vector<1x1xf32>
    %96 = vector.broadcast %95 : vector<1x1xf32> to vector<1x16xf32>
    %97 = arith.mulf %96, %9 : vector<1x16xf32>
    %98 = arith.addf %94, %97 : vector<1x16xf32>
    %99 = vector.extract_strided_slice %88 {offsets = [0, 2], sizes = [1, 1], strides = [1, 1]} : vector<1x4xf32> to vector<1x1xf32>
    %100 = vector.broadcast %99 : vector<1x1xf32> to vector<1x16xf32>
    %101 = arith.mulf %100, %10 : vector<1x16xf32>
    %102 = vector.extract_strided_slice %88 {offsets = [0, 3], sizes = [1, 1], strides = [1, 1]} : vector<1x4xf32> to vector<1x1xf32>
    %103 = vector.broadcast %102 : vector<1x1xf32> to vector<1x16xf32>
    %104 = arith.mulf %103, %11 : vector<1x16xf32>
    %105 = arith.addf %101, %104 : vector<1x16xf32>
    %106 = arith.addf %98, %105 : vector<1x16xf32>
    %107 = vector.extract_strided_slice %6 {offsets = [2, 0], sizes = [1, 16], strides = [1, 1]} : vector<10x16xf32> to vector<1x16xf32>
    %108 = arith.addf %107, %106 : vector<1x16xf32>
    %109 = arith.negf %108 : vector<1x16xf32>
    %110 = math.exp %109 : vector<1x16xf32>
    %cst_24 = arith.constant 1.000000e+00 : f32
    %111 = vector.broadcast %cst_24 : f32 to vector<1x16xf32>
    %112 = arith.addf %111, %110 : vector<1x16xf32>
    %113 = arith.divf %111, %112 : vector<1x16xf32>
    %114 = vector.extract_strided_slice %113 {offsets = [0, 0], sizes = [1, 4], strides = [1, 1]} : vector<1x16xf32> to vector<1x4xf32>
    %115 = vector.extract_strided_slice %113 {offsets = [0, 4], sizes = [1, 4], strides = [1, 1]} : vector<1x16xf32> to vector<1x4xf32>
    %116 = vector.extract_strided_slice %113 {offsets = [0, 8], sizes = [1, 4], strides = [1, 1]} : vector<1x16xf32> to vector<1x4xf32>
    %cst_25 = arith.constant 2.000000e+00 : f32
    %117 = vector.broadcast %cst_25 : f32 to vector<1x4xf32>
    %118 = arith.mulf %117, %116 : vector<1x4xf32>
    %cst_26 = arith.constant 1.000000e+00 : f32
    %119 = vector.broadcast %cst_26 : f32 to vector<1x4xf32>
    %120 = arith.subf %118, %119 : vector<1x4xf32>
    %121 = vector.extract_strided_slice %113 {offsets = [0, 12], sizes = [1, 4], strides = [1, 1]} : vector<1x16xf32> to vector<1x4xf32>
    %122 = arith.mulf %115, %86 : vector<1x4xf32>
    %123 = arith.mulf %114, %120 : vector<1x4xf32>
    %124 = arith.addf %122, %123 : vector<1x4xf32>
    %125 = math.tanh %124 : vector<1x4xf32>
    %126 = arith.mulf %121, %125 : vector<1x4xf32>
    %c0_27 = arith.constant 0 : index
    %c2 = arith.constant 2 : index
    %c4_28 = arith.constant 4 : index
    %127 = vector.load %arg8[%c0_27, %c2, %c4_28] : memref<1x10x8xf32, #tpu.memory_space<vmem>>, vector<1x1x4xf32>
    %128 = vector.shape_cast %127 : vector<1x1x4xf32> to vector<1x4xf32>
    %129 = vector.shape_cast %126 : vector<1x4xf32> to vector<1x1x4xf32>
    tpu.vector_store %arg8[%c0_27, %c2, %c4_28], %129 {strides = array<i32>} : memref<1x10x8xf32, #tpu.memory_space<vmem>>, vector<1x1x4xf32>,
    %130 = vector.extract_strided_slice %126 {offsets = [0, 0], sizes = [1, 1], strides = [1, 1]} : vector<1x4xf32> to vector<1x1xf32>
    %131 = vector.broadcast %130 : vector<1x1xf32> to vector<1x16xf32>
    %132 = arith.mulf %131, %8 : vector<1x16xf32>
    %133 = vector.extract_strided_slice %126 {offsets = [0, 1], sizes = [1, 1], strides = [1, 1]} : vector<1x4xf32> to vector<1x1xf32>
    %134 = vector.broadcast %133 : vector<1x1xf32> to vector<1x16xf32>
    %135 = arith.mulf %134, %9 : vector<1x16xf32>
    %136 = arith.addf %132, %135 : vector<1x16xf32>
    %137 = vector.extract_strided_slice %126 {offsets = [0, 2], sizes = [1, 1], strides = [1, 1]} : vector<1x4xf32> to vector<1x1xf32>
    %138 = vector.broadcast %137 : vector<1x1xf32> to vector<1x16xf32>
    %139 = arith.mulf %138, %10 : vector<1x16xf32>
    %140 = vector.extract_strided_slice %126 {offsets = [0, 3], sizes = [1, 1], strides = [1, 1]} : vector<1x4xf32> to vector<1x1xf32>
    %141 = vector.broadcast %140 : vector<1x1xf32> to vector<1x16xf32>
    %142 = arith.mulf %141, %11 : vector<1x16xf32>
    %143 = arith.addf %139, %142 : vector<1x16xf32>
    %144 = arith.addf %136, %143 : vector<1x16xf32>
    %145 = vector.extract_strided_slice %6 {offsets = [3, 0], sizes = [1, 16], strides = [1, 1]} : vector<10x16xf32> to vector<1x16xf32>
    %146 = arith.addf %145, %144 : vector<1x16xf32>
    %147 = arith.negf %146 : vector<1x16xf32>
    %148 = math.exp %147 : vector<1x16xf32>
    %cst_29 = arith.constant 1.000000e+00 : f32
    %149 = vector.broadcast %cst_29 : f32 to vector<1x16xf32>
    %150 = arith.addf %149, %148 : vector<1x16xf32>
    %151 = arith.divf %149, %150 : vector<1x16xf32>
    %152 = vector.extract_strided_slice %151 {offsets = [0, 0], sizes = [1, 4], strides = [1, 1]} : vector<1x16xf32> to vector<1x4xf32>
    %153 = vector.extract_strided_slice %151 {offsets = [0, 4], sizes = [1, 4], strides = [1, 1]} : vector<1x16xf32> to vector<1x4xf32>
    %154 = vector.extract_strided_slice %151 {offsets = [0, 8], sizes = [1, 4], strides = [1, 1]} : vector<1x16xf32> to vector<1x4xf32>
    %cst_30 = arith.constant 2.000000e+00 : f32
    %155 = vector.broadcast %cst_30 : f32 to vector<1x4xf32>
    %156 = arith.mulf %155, %154 : vector<1x4xf32>
    %cst_31 = arith.constant 1.000000e+00 : f32
    %157 = vector.broadcast %cst_31 : f32 to vector<1x4xf32>
    %158 = arith.subf %156, %157 : vector<1x4xf32>
    %159 = vector.extract_strided_slice %151 {offsets = [0, 12], sizes = [1, 4], strides = [1, 1]} : vector<1x16xf32> to vector<1x4xf32>
    %160 = arith.mulf %153, %124 : vector<1x4xf32>
    %161 = arith.mulf %152, %158 : vector<1x4xf32>
    %162 = arith.addf %160, %161 : vector<1x4xf32>
    %163 = math.tanh %162 : vector<1x4xf32>
    %164 = arith.mulf %159, %163 : vector<1x4xf32>
    %c0_32 = arith.constant 0 : index
    %c3 = arith.constant 3 : index
    %c4_33 = arith.constant 4 : index
    %165 = vector.load %arg8[%c0_32, %c3, %c4_33] : memref<1x10x8xf32, #tpu.memory_space<vmem>>, vector<1x1x4xf32>
    %166 = vector.shape_cast %165 : vector<1x1x4xf32> to vector<1x4xf32>
    %167 = vector.shape_cast %164 : vector<1x4xf32> to vector<1x1x4xf32>
    tpu.vector_store %arg8[%c0_32, %c3, %c4_33], %167 {strides = array<i32>} : memref<1x10x8xf32, #tpu.memory_space<vmem>>, vector<1x1x4xf32>,
    %168 = vector.extract_strided_slice %164 {offsets = [0, 0], sizes = [1, 1], strides = [1, 1]} : vector<1x4xf32> to vector<1x1xf32>
    %169 = vector.broadcast %168 : vector<1x1xf32> to vector<1x16xf32>
    %170 = arith.mulf %169, %8 : vector<1x16xf32>
    %171 = vector.extract_strided_slice %164 {offsets = [0, 1], sizes = [1, 1], strides = [1, 1]} : vector<1x4xf32> to vector<1x1xf32>
    %172 = vector.broadcast %171 : vector<1x1xf32> to vector<1x16xf32>
    %173 = arith.mulf %172, %9 : vector<1x16xf32>
    %174 = arith.addf %170, %173 : vector<1x16xf32>
    %175 = vector.extract_strided_slice %164 {offsets = [0, 2], sizes = [1, 1], strides = [1, 1]} : vector<1x4xf32> to vector<1x1xf32>
    %176 = vector.broadcast %175 : vector<1x1xf32> to vector<1x16xf32>
    %177 = arith.mulf %176, %10 : vector<1x16xf32>
    %178 = vector.extract_strided_slice %164 {offsets = [0, 3], sizes = [1, 1], strides = [1, 1]} : vector<1x4xf32> to vector<1x1xf32>
    %179 = vector.broadcast %178 : vector<1x1xf32> to vector<1x16xf32>
    %180 = arith.mulf %179, %11 : vector<1x16xf32>
    %181 = arith.addf %177, %180 : vector<1x16xf32>
    %182 = arith.addf %174, %181 : vector<1x16xf32>
    %183 = vector.extract_strided_slice %6 {offsets = [4, 0], sizes = [1, 16], strides = [1, 1]} : vector<10x16xf32> to vector<1x16xf32>
    %184 = arith.addf %183, %182 : vector<1x16xf32>
    %185 = arith.negf %184 : vector<1x16xf32>
    %186 = math.exp %185 : vector<1x16xf32>
    %cst_34 = arith.constant 1.000000e+00 : f32
    %187 = vector.broadcast %cst_34 : f32 to vector<1x16xf32>
    %188 = arith.addf %187, %186 : vector<1x16xf32>
    %189 = arith.divf %187, %188 : vector<1x16xf32>
    %190 = vector.extract_strided_slice %189 {offsets = [0, 0], sizes = [1, 4], strides = [1, 1]} : vector<1x16xf32> to vector<1x4xf32>
    %191 = vector.extract_strided_slice %189 {offsets = [0, 4], sizes = [1, 4], strides = [1, 1]} : vector<1x16xf32> to vector<1x4xf32>
    %192 = vector.extract_strided_slice %189 {offsets = [0, 8], sizes = [1, 4], strides = [1, 1]} : vector<1x16xf32> to vector<1x4xf32>
    %cst_35 = arith.constant 2.000000e+00 : f32
    %193 = vector.broadcast %cst_35 : f32 to vector<1x4xf32>
    %194 = arith.mulf %193, %192 : vector<1x4xf32>
    %cst_36 = arith.constant 1.000000e+00 : f32
    %195 = vector.broadcast %cst_36 : f32 to vector<1x4xf32>
    %196 = arith.subf %194, %195 : vector<1x4xf32>
    %197 = vector.extract_strided_slice %189 {offsets = [0, 12], sizes = [1, 4], strides = [1, 1]} : vector<1x16xf32> to vector<1x4xf32>
    %198 = arith.mulf %191, %162 : vector<1x4xf32>
    %199 = arith.mulf %190, %196 : vector<1x4xf32>
    %200 = arith.addf %198, %199 : vector<1x4xf32>
    %201 = math.tanh %200 : vector<1x4xf32>
    %202 = arith.mulf %197, %201 : vector<1x4xf32>
    %c0_37 = arith.constant 0 : index
    %c4_38 = arith.constant 4 : index
    %c4_39 = arith.constant 4 : index
    %203 = vector.load %arg8[%c0_37, %c4_38, %c4_39] : memref<1x10x8xf32, #tpu.memory_space<vmem>>, vector<1x1x4xf32>
    %204 = vector.shape_cast %203 : vector<1x1x4xf32> to vector<1x4xf32>
    %205 = vector.shape_cast %202 : vector<1x4xf32> to vector<1x1x4xf32>
    tpu.vector_store %arg8[%c0_37, %c4_38, %c4_39], %205 {strides = array<i32>} : memref<1x10x8xf32, #tpu.memory_space<vmem>>, vector<1x1x4xf32>,
    %206 = vector.extract_strided_slice %202 {offsets = [0, 0], sizes = [1, 1], strides = [1, 1]} : vector<1x4xf32> to vector<1x1xf32>
    %207 = vector.broadcast %206 : vector<1x1xf32> to vector<1x16xf32>
    %208 = arith.mulf %207, %8 : vector<1x16xf32>
    %209 = vector.extract_strided_slice %202 {offsets = [0, 1], sizes = [1, 1], strides = [1, 1]} : vector<1x4xf32> to vector<1x1xf32>
    %210 = vector.broadcast %209 : vector<1x1xf32> to vector<1x16xf32>
    %211 = arith.mulf %210, %9 : vector<1x16xf32>
    %212 = arith.addf %208, %211 : vector<1x16xf32>
    %213 = vector.extract_strided_slice %202 {offsets = [0, 2], sizes = [1, 1], strides = [1, 1]} : vector<1x4xf32> to vector<1x1xf32>
    %214 = vector.broadcast %213 : vector<1x1xf32> to vector<1x16xf32>
    %215 = arith.mulf %214, %10 : vector<1x16xf32>
    %216 = vector.extract_strided_slice %202 {offsets = [0, 3], sizes = [1, 1], strides = [1, 1]} : vector<1x4xf32> to vector<1x1xf32>
    %217 = vector.broadcast %216 : vector<1x1xf32> to vector<1x16xf32>
    %218 = arith.mulf %217, %11 : vector<1x16xf32>
    %219 = arith.addf %215, %218 : vector<1x16xf32>
    %220 = arith.addf %212, %219 : vector<1x16xf32>
    %221 = vector.extract_strided_slice %6 {offsets = [5, 0], sizes = [1, 16], strides = [1, 1]} : vector<10x16xf32> to vector<1x16xf32>
    %222 = arith.addf %221, %220 : vector<1x16xf32>
    %223 = arith.negf %222 : vector<1x16xf32>
    %224 = math.exp %223 : vector<1x16xf32>
    %cst_40 = arith.constant 1.000000e+00 : f32
    %225 = vector.broadcast %cst_40 : f32 to vector<1x16xf32>
    %226 = arith.addf %225, %224 : vector<1x16xf32>
    %227 = arith.divf %225, %226 : vector<1x16xf32>
    %228 = vector.extract_strided_slice %227 {offsets = [0, 0], sizes = [1, 4], strides = [1, 1]} : vector<1x16xf32> to vector<1x4xf32>
    %229 = vector.extract_strided_slice %227 {offsets = [0, 4], sizes = [1, 4], strides = [1, 1]} : vector<1x16xf32> to vector<1x4xf32>
    %230 = vector.extract_strided_slice %227 {offsets = [0, 8], sizes = [1, 4], strides = [1, 1]} : vector<1x16xf32> to vector<1x4xf32>
    %cst_41 = arith.constant 2.000000e+00 : f32
    %231 = vector.broadcast %cst_41 : f32 to vector<1x4xf32>
    %232 = arith.mulf %231, %230 : vector<1x4xf32>
    %cst_42 = arith.constant 1.000000e+00 : f32
    %233 = vector.broadcast %cst_42 : f32 to vector<1x4xf32>
    %234 = arith.subf %232, %233 : vector<1x4xf32>
    %235 = vector.extract_strided_slice %227 {offsets = [0, 12], sizes = [1, 4], strides = [1, 1]} : vector<1x16xf32> to vector<1x4xf32>
    %236 = arith.mulf %229, %200 : vector<1x4xf32>
    %237 = arith.mulf %228, %234 : vector<1x4xf32>
    %238 = arith.addf %236, %237 : vector<1x4xf32>
    %239 = math.tanh %238 : vector<1x4xf32>
    %240 = arith.mulf %235, %239 : vector<1x4xf32>
    %c0_43 = arith.constant 0 : index
    %c5 = arith.constant 5 : index
    %c4_44 = arith.constant 4 : index
    %241 = vector.load %arg8[%c0_43, %c5, %c4_44] : memref<1x10x8xf32, #tpu.memory_space<vmem>>, vector<1x1x4xf32>
    %242 = vector.shape_cast %241 : vector<1x1x4xf32> to vector<1x4xf32>
    %243 = vector.shape_cast %240 : vector<1x4xf32> to vector<1x1x4xf32>
    tpu.vector_store %arg8[%c0_43, %c5, %c4_44], %243 {strides = array<i32>} : memref<1x10x8xf32, #tpu.memory_space<vmem>>, vector<1x1x4xf32>,
    %244 = vector.extract_strided_slice %240 {offsets = [0, 0], sizes = [1, 1], strides = [1, 1]} : vector<1x4xf32> to vector<1x1xf32>
    %245 = vector.broadcast %244 : vector<1x1xf32> to vector<1x16xf32>
    %246 = arith.mulf %245, %8 : vector<1x16xf32>
    %247 = vector.extract_strided_slice %240 {offsets = [0, 1], sizes = [1, 1], strides = [1, 1]} : vector<1x4xf32> to vector<1x1xf32>
    %248 = vector.broadcast %247 : vector<1x1xf32> to vector<1x16xf32>
    %249 = arith.mulf %248, %9 : vector<1x16xf32>
    %250 = arith.addf %246, %249 : vector<1x16xf32>
    %251 = vector.extract_strided_slice %240 {offsets = [0, 2], sizes = [1, 1], strides = [1, 1]} : vector<1x4xf32> to vector<1x1xf32>
    %252 = vector.broadcast %251 : vector<1x1xf32> to vector<1x16xf32>
    %253 = arith.mulf %252, %10 : vector<1x16xf32>
    %254 = vector.extract_strided_slice %240 {offsets = [0, 3], sizes = [1, 1], strides = [1, 1]} : vector<1x4xf32> to vector<1x1xf32>
    %255 = vector.broadcast %254 : vector<1x1xf32> to vector<1x16xf32>
    %256 = arith.mulf %255, %11 : vector<1x16xf32>
    %257 = arith.addf %253, %256 : vector<1x16xf32>
    %258 = arith.addf %250, %257 : vector<1x16xf32>
    %259 = vector.extract_strided_slice %6 {offsets = [6, 0], sizes = [1, 16], strides = [1, 1]} : vector<10x16xf32> to vector<1x16xf32>
    %260 = arith.addf %259, %258 : vector<1x16xf32>
    %261 = arith.negf %260 : vector<1x16xf32>
    %262 = math.exp %261 : vector<1x16xf32>
    %cst_45 = arith.constant 1.000000e+00 : f32
    %263 = vector.broadcast %cst_45 : f32 to vector<1x16xf32>
    %264 = arith.addf %263, %262 : vector<1x16xf32>
    %265 = arith.divf %263, %264 : vector<1x16xf32>
    %266 = vector.extract_strided_slice %265 {offsets = [0, 0], sizes = [1, 4], strides = [1, 1]} : vector<1x16xf32> to vector<1x4xf32>
    %267 = vector.extract_strided_slice %265 {offsets = [0, 4], sizes = [1, 4], strides = [1, 1]} : vector<1x16xf32> to vector<1x4xf32>
    %268 = vector.extract_strided_slice %265 {offsets = [0, 8], sizes = [1, 4], strides = [1, 1]} : vector<1x16xf32> to vector<1x4xf32>
    %cst_46 = arith.constant 2.000000e+00 : f32
    %269 = vector.broadcast %cst_46 : f32 to vector<1x4xf32>
    %270 = arith.mulf %269, %268 : vector<1x4xf32>
    %cst_47 = arith.constant 1.000000e+00 : f32
    %271 = vector.broadcast %cst_47 : f32 to vector<1x4xf32>
    %272 = arith.subf %270, %271 : vector<1x4xf32>
    %273 = vector.extract_strided_slice %265 {offsets = [0, 12], sizes = [1, 4], strides = [1, 1]} : vector<1x16xf32> to vector<1x4xf32>
    %274 = arith.mulf %267, %238 : vector<1x4xf32>
    %275 = arith.mulf %266, %272 : vector<1x4xf32>
    %276 = arith.addf %274, %275 : vector<1x4xf32>
    %277 = math.tanh %276 : vector<1x4xf32>
    %278 = arith.mulf %273, %277 : vector<1x4xf32>
    %c0_48 = arith.constant 0 : index
    %c6 = arith.constant 6 : index
    %c4_49 = arith.constant 4 : index
    %279 = vector.load %arg8[%c0_48, %c6, %c4_49] : memref<1x10x8xf32, #tpu.memory_space<vmem>>, vector<1x1x4xf32>
    %280 = vector.shape_cast %279 : vector<1x1x4xf32> to vector<1x4xf32>
    %281 = vector.shape_cast %278 : vector<1x4xf32> to vector<1x1x4xf32>
    tpu.vector_store %arg8[%c0_48, %c6, %c4_49], %281 {strides = array<i32>} : memref<1x10x8xf32, #tpu.memory_space<vmem>>, vector<1x1x4xf32>,
    %282 = vector.extract_strided_slice %278 {offsets = [0, 0], sizes = [1, 1], strides = [1, 1]} : vector<1x4xf32> to vector<1x1xf32>
    %283 = vector.broadcast %282 : vector<1x1xf32> to vector<1x16xf32>
    %284 = arith.mulf %283, %8 : vector<1x16xf32>
    %285 = vector.extract_strided_slice %278 {offsets = [0, 1], sizes = [1, 1], strides = [1, 1]} : vector<1x4xf32> to vector<1x1xf32>
    %286 = vector.broadcast %285 : vector<1x1xf32> to vector<1x16xf32>
    %287 = arith.mulf %286, %9 : vector<1x16xf32>
    %288 = arith.addf %284, %287 : vector<1x16xf32>
    %289 = vector.extract_strided_slice %278 {offsets = [0, 2], sizes = [1, 1], strides = [1, 1]} : vector<1x4xf32> to vector<1x1xf32>
    %290 = vector.broadcast %289 : vector<1x1xf32> to vector<1x16xf32>
    %291 = arith.mulf %290, %10 : vector<1x16xf32>
    %292 = vector.extract_strided_slice %278 {offsets = [0, 3], sizes = [1, 1], strides = [1, 1]} : vector<1x4xf32> to vector<1x1xf32>
    %293 = vector.broadcast %292 : vector<1x1xf32> to vector<1x16xf32>
    %294 = arith.mulf %293, %11 : vector<1x16xf32>
    %295 = arith.addf %291, %294 : vector<1x16xf32>
    %296 = arith.addf %288, %295 : vector<1x16xf32>
    %297 = vector.extract_strided_slice %6 {offsets = [7, 0], sizes = [1, 16], strides = [1, 1]} : vector<10x16xf32> to vector<1x16xf32>
    %298 = arith.addf %297, %296 : vector<1x16xf32>
    %299 = arith.negf %298 : vector<1x16xf32>
    %300 = math.exp %299 : vector<1x16xf32>
    %cst_50 = arith.constant 1.000000e+00 : f32
    %301 = vector.broadcast %cst_50 : f32 to vector<1x16xf32>
    %302 = arith.addf %301, %300 : vector<1x16xf32>
    %303 = arith.divf %301, %302 : vector<1x16xf32>
    %304 = vector.extract_strided_slice %303 {offsets = [0, 0], sizes = [1, 4], strides = [1, 1]} : vector<1x16xf32> to vector<1x4xf32>
    %305 = vector.extract_strided_slice %303 {offsets = [0, 4], sizes = [1, 4], strides = [1, 1]} : vector<1x16xf32> to vector<1x4xf32>
    %306 = vector.extract_strided_slice %303 {offsets = [0, 8], sizes = [1, 4], strides = [1, 1]} : vector<1x16xf32> to vector<1x4xf32>
    %cst_51 = arith.constant 2.000000e+00 : f32
    %307 = vector.broadcast %cst_51 : f32 to vector<1x4xf32>
    %308 = arith.mulf %307, %306 : vector<1x4xf32>
    %cst_52 = arith.constant 1.000000e+00 : f32
    %309 = vector.broadcast %cst_52 : f32 to vector<1x4xf32>
    %310 = arith.subf %308, %309 : vector<1x4xf32>
    %311 = vector.extract_strided_slice %303 {offsets = [0, 12], sizes = [1, 4], strides = [1, 1]} : vector<1x16xf32> to vector<1x4xf32>
    %312 = arith.mulf %305, %276 : vector<1x4xf32>
    %313 = arith.mulf %304, %310 : vector<1x4xf32>
    %314 = arith.addf %312, %313 : vector<1x4xf32>
    %315 = math.tanh %314 : vector<1x4xf32>
    %316 = arith.mulf %311, %315 : vector<1x4xf32>
    %c0_53 = arith.constant 0 : index
    %c7 = arith.constant 7 : index
    %c4_54 = arith.constant 4 : index
    %317 = vector.load %arg8[%c0_53, %c7, %c4_54] : memref<1x10x8xf32, #tpu.memory_space<vmem>>, vector<1x1x4xf32>
    %318 = vector.shape_cast %317 : vector<1x1x4xf32> to vector<1x4xf32>
    %319 = vector.shape_cast %316 : vector<1x4xf32> to vector<1x1x4xf32>
    tpu.vector_store %arg8[%c0_53, %c7, %c4_54], %319 {strides = array<i32>} : memref<1x10x8xf32, #tpu.memory_space<vmem>>, vector<1x1x4xf32>,
    %320 = vector.extract_strided_slice %316 {offsets = [0, 0], sizes = [1, 1], strides = [1, 1]} : vector<1x4xf32> to vector<1x1xf32>
    %321 = vector.broadcast %320 : vector<1x1xf32> to vector<1x16xf32>
    %322 = arith.mulf %321, %8 : vector<1x16xf32>
    %323 = vector.extract_strided_slice %316 {offsets = [0, 1], sizes = [1, 1], strides = [1, 1]} : vector<1x4xf32> to vector<1x1xf32>
    %324 = vector.broadcast %323 : vector<1x1xf32> to vector<1x16xf32>
    %325 = arith.mulf %324, %9 : vector<1x16xf32>
    %326 = arith.addf %322, %325 : vector<1x16xf32>
    %327 = vector.extract_strided_slice %316 {offsets = [0, 2], sizes = [1, 1], strides = [1, 1]} : vector<1x4xf32> to vector<1x1xf32>
    %328 = vector.broadcast %327 : vector<1x1xf32> to vector<1x16xf32>
    %329 = arith.mulf %328, %10 : vector<1x16xf32>
    %330 = vector.extract_strided_slice %316 {offsets = [0, 3], sizes = [1, 1], strides = [1, 1]} : vector<1x4xf32> to vector<1x1xf32>
    %331 = vector.broadcast %330 : vector<1x1xf32> to vector<1x16xf32>
    %332 = arith.mulf %331, %11 : vector<1x16xf32>
    %333 = arith.addf %329, %332 : vector<1x16xf32>
    %334 = arith.addf %326, %333 : vector<1x16xf32>
    %335 = vector.extract_strided_slice %6 {offsets = [8, 0], sizes = [1, 16], strides = [1, 1]} : vector<10x16xf32> to vector<1x16xf32>
    %336 = arith.addf %335, %334 : vector<1x16xf32>
    %337 = arith.negf %336 : vector<1x16xf32>
    %338 = math.exp %337 : vector<1x16xf32>
    %cst_55 = arith.constant 1.000000e+00 : f32
    %339 = vector.broadcast %cst_55 : f32 to vector<1x16xf32>
    %340 = arith.addf %339, %338 : vector<1x16xf32>
    %341 = arith.divf %339, %340 : vector<1x16xf32>
    %342 = vector.extract_strided_slice %341 {offsets = [0, 0], sizes = [1, 4], strides = [1, 1]} : vector<1x16xf32> to vector<1x4xf32>
    %343 = vector.extract_strided_slice %341 {offsets = [0, 4], sizes = [1, 4], strides = [1, 1]} : vector<1x16xf32> to vector<1x4xf32>
    %344 = vector.extract_strided_slice %341 {offsets = [0, 8], sizes = [1, 4], strides = [1, 1]} : vector<1x16xf32> to vector<1x4xf32>
    %cst_56 = arith.constant 2.000000e+00 : f32
    %345 = vector.broadcast %cst_56 : f32 to vector<1x4xf32>
    %346 = arith.mulf %345, %344 : vector<1x4xf32>
    %cst_57 = arith.constant 1.000000e+00 : f32
    %347 = vector.broadcast %cst_57 : f32 to vector<1x4xf32>
    %348 = arith.subf %346, %347 : vector<1x4xf32>
    %349 = vector.extract_strided_slice %341 {offsets = [0, 12], sizes = [1, 4], strides = [1, 1]} : vector<1x16xf32> to vector<1x4xf32>
    %350 = arith.mulf %343, %314 : vector<1x4xf32>
    %351 = arith.mulf %342, %348 : vector<1x4xf32>
    %352 = arith.addf %350, %351 : vector<1x4xf32>
    %353 = math.tanh %352 : vector<1x4xf32>
    %354 = arith.mulf %349, %353 : vector<1x4xf32>
    %c0_58 = arith.constant 0 : index
    %c8 = arith.constant 8 : index
    %c4_59 = arith.constant 4 : index
    %355 = vector.load %arg8[%c0_58, %c8, %c4_59] : memref<1x10x8xf32, #tpu.memory_space<vmem>>, vector<1x1x4xf32>
    %356 = vector.shape_cast %355 : vector<1x1x4xf32> to vector<1x4xf32>
    %357 = vector.shape_cast %354 : vector<1x4xf32> to vector<1x1x4xf32>
    tpu.vector_store %arg8[%c0_58, %c8, %c4_59], %357 {strides = array<i32>} : memref<1x10x8xf32, #tpu.memory_space<vmem>>, vector<1x1x4xf32>,
    %358 = vector.extract_strided_slice %354 {offsets = [0, 0], sizes = [1, 1], strides = [1, 1]} : vector<1x4xf32> to vector<1x1xf32>
    %359 = vector.broadcast %358 : vector<1x1xf32> to vector<1x16xf32>
    %360 = arith.mulf %359, %8 : vector<1x16xf32>
    %361 = vector.extract_strided_slice %354 {offsets = [0, 1], sizes = [1, 1], strides = [1, 1]} : vector<1x4xf32> to vector<1x1xf32>
    %362 = vector.broadcast %361 : vector<1x1xf32> to vector<1x16xf32>
    %363 = arith.mulf %362, %9 : vector<1x16xf32>
    %364 = arith.addf %360, %363 : vector<1x16xf32>
    %365 = vector.extract_strided_slice %354 {offsets = [0, 2], sizes = [1, 1], strides = [1, 1]} : vector<1x4xf32> to vector<1x1xf32>
    %366 = vector.broadcast %365 : vector<1x1xf32> to vector<1x16xf32>
    %367 = arith.mulf %366, %10 : vector<1x16xf32>
    %368 = vector.extract_strided_slice %354 {offsets = [0, 3], sizes = [1, 1], strides = [1, 1]} : vector<1x4xf32> to vector<1x1xf32>
    %369 = vector.broadcast %368 : vector<1x1xf32> to vector<1x16xf32>
    %370 = arith.mulf %369, %11 : vector<1x16xf32>
    %371 = arith.addf %367, %370 : vector<1x16xf32>
    %372 = arith.addf %364, %371 : vector<1x16xf32>
    %373 = vector.extract_strided_slice %6 {offsets = [9, 0], sizes = [1, 16], strides = [1, 1]} : vector<10x16xf32> to vector<1x16xf32>
    %374 = arith.addf %373, %372 : vector<1x16xf32>
    %375 = arith.negf %374 : vector<1x16xf32>
    %376 = math.exp %375 : vector<1x16xf32>
    %cst_60 = arith.constant 1.000000e+00 : f32
    %377 = vector.broadcast %cst_60 : f32 to vector<1x16xf32>
    %378 = arith.addf %377, %376 : vector<1x16xf32>
    %379 = arith.divf %377, %378 : vector<1x16xf32>
    %380 = vector.extract_strided_slice %379 {offsets = [0, 0], sizes = [1, 4], strides = [1, 1]} : vector<1x16xf32> to vector<1x4xf32>
    %381 = vector.extract_strided_slice %379 {offsets = [0, 4], sizes = [1, 4], strides = [1, 1]} : vector<1x16xf32> to vector<1x4xf32>
    %382 = vector.extract_strided_slice %379 {offsets = [0, 8], sizes = [1, 4], strides = [1, 1]} : vector<1x16xf32> to vector<1x4xf32>
    %cst_61 = arith.constant 2.000000e+00 : f32
    %383 = vector.broadcast %cst_61 : f32 to vector<1x4xf32>
    %384 = arith.mulf %383, %382 : vector<1x4xf32>
    %cst_62 = arith.constant 1.000000e+00 : f32
    %385 = vector.broadcast %cst_62 : f32 to vector<1x4xf32>
    %386 = arith.subf %384, %385 : vector<1x4xf32>
    %387 = vector.extract_strided_slice %379 {offsets = [0, 12], sizes = [1, 4], strides = [1, 1]} : vector<1x16xf32> to vector<1x4xf32>
    %388 = arith.mulf %381, %352 : vector<1x4xf32>
    %389 = arith.mulf %380, %386 : vector<1x4xf32>
    %390 = arith.addf %388, %389 : vector<1x4xf32>
    %391 = math.tanh %390 : vector<1x4xf32>
    %392 = arith.mulf %387, %391 : vector<1x4xf32>
    %c0_63 = arith.constant 0 : index
    %c9 = arith.constant 9 : index
    %c4_64 = arith.constant 4 : index
    %393 = vector.load %arg8[%c0_63, %c9, %c4_64] : memref<1x10x8xf32, #tpu.memory_space<vmem>>, vector<1x1x4xf32>
    %394 = vector.shape_cast %393 : vector<1x1x4xf32> to vector<1x4xf32>
    %395 = vector.shape_cast %392 : vector<1x4xf32> to vector<1x1x4xf32>
    tpu.vector_store %arg8[%c0_63, %c9, %c4_64], %395 {strides = array<i32>} : memref<1x10x8xf32, #tpu.memory_space<vmem>>, vector<1x1x4xf32>,
    %c0_65 = arith.constant 0 : index
    %c0_66 = arith.constant 0 : index
    %c4_67 = arith.constant 4 : index
    %396 = vector.load %arg8[%c0_65, %c0_66, %c4_67] : memref<1x10x8xf32, #tpu.memory_space<vmem>>, vector<1x10x4xf32>
    %397 = vector.shape_cast %396 : vector<1x10x4xf32> to vector<10x4xf32>
    %c0_68 = arith.constant 0 : index
    %c0_69 = arith.constant 0 : index
    %c0_70 = arith.constant 0 : index
    %398 = vector.load %arg7[%c0_68, %c0_69, %c0_70] : memref<1x10x4xf32, #tpu.memory_space<vmem>>, vector<1x10x4xf32>
    %399 = vector.shape_cast %398 : vector<1x10x4xf32> to vector<10x4xf32>
    %cst_71 = arith.constant dense<0.000000e+00> : vector<10x10xf32>
    %400 = tpu.matmul %397, %399, %cst_71 {dimension_numbers = #tpu.dot_dimension_numbers<[1], [1], [0], [0], [0, 0, 1, 0], [], []>} : vector<10x4xf32>, vector<10x4xf32>, vector<10x10xf32> -> vector<10x10xf32>
    %401 = math.exp %400 : vector<10x10xf32>
    %cst_72 = arith.constant dense<0.000000e+00> : vector<10xf32>
    %402 = vector.multi_reduction <add>, %401, %cst_72 [1] : vector<10x10xf32> to vector<10xf32>
    %403 = vector.shape_cast %402 : vector<10xf32> to vector<10x1xf32>
    %404 = tpu.iota {dimensions = array<i32: 1>} : vector<10x10xi32>
    %c9_i32 = arith.constant 9 : i32
    %405 = vector.broadcast %c9_i32 : i32 to vector<10x10xi32>
    %406 = arith.cmpi eq, %404, %405 : vector<10x10xi32>
    %407 = math.log %403 : vector<10x1xf32>
    %cst_73 = arith.constant 1.000000e+01 : f32
    %408 = vector.broadcast %cst_73 : f32 to vector<10x1xf32>
    %409 = arith.mulf %408, %407 : vector<10x1xf32>
    %410 = vector.broadcast %409 : vector<10x1xf32> to vector<10x10xf32>
    %411 = arith.subf %400, %410 : vector<10x10xf32>
    %412 = arith.select %406, %411, %400 : vector<10x10xi1>, vector<10x10xf32>
    %413 = tpu.iota {dimensions = array<i32: 0>} : vector<10x10xi32>
    %414 = tpu.iota {dimensions = array<i32: 1>} : vector<10x10xi32>
    %415 = arith.cmpi sle, %414, %413 : vector<10x10xi32>
    %416 = arith.extui %415 : vector<10x10xi1> to vector<10x10xi32>
    %417 = arith.sitofp %416 : vector<10x10xi32> to vector<10x10xf32>
    %cst_74 = arith.constant dense<0.000000e+00> : vector<10x10xf32>
    %418 = tpu.matmul %417, %412, %cst_74 {dimension_numbers = #tpu.dot_dimension_numbers<[1], [0], [0], [1], [0, 0, 1, 1], [], []>} : vector<10x10xf32>, vector<10x10xf32>, vector<10x10xf32> -> vector<10x10xf32>
    %419 = math.exp %418 : vector<10x10xf32>
    %cst_75 = arith.constant dense<0.000000e+00> : vector<10x4xf32>
    %420 = tpu.matmul %419, %399, %cst_75 {dimension_numbers = #tpu.dot_dimension_numbers<[1], [0], [0], [1], [0, 0, 1, 1], [], []>} : vector<10x10xf32>, vector<10x4xf32>, vector<10x4xf32> -> vector<10x4xf32>
    %c0_76 = arith.constant 0 : index
    %c0_77 = arith.constant 0 : index
    %c0_78 = arith.constant 0 : index
    %421 = vector.load %arg8[%c0_76, %c0_77, %c0_78] : memref<1x10x8xf32, #tpu.memory_space<vmem>>, vector<1x10x4xf32>
    %422 = vector.shape_cast %421 : vector<1x10x4xf32> to vector<10x4xf32>
    %423 = vector.shape_cast %420 : vector<10x4xf32> to vector<1x10x4xf32>
    tpu.vector_store %arg8[%c0_76, %c0_77, %c0_78], %423 {strides = array<i32>} : memref<1x10x8xf32, #tpu.memory_space<vmem>>, vector<1x10x4xf32>,
    return
  }
  func.func @transform_0(%arg0: i32) -> (i32, i32, i32) {
    %c0_i32 = arith.constant 0 : i32
    %c0_i32_0 = arith.constant 0 : i32
    %c0_i32_1 = arith.constant 0 : i32
    return %arg0, %c0_i32, %c0_i32_0 : i32, i32, i32
  }
  func.func @transform_1(%arg0: i32) -> (i32, i32, i32) {
    %c0_i32 = arith.constant 0 : i32
    %c0_i32_0 = arith.constant 0 : i32
    %c0_i32_1 = arith.constant 0 : i32
    return %arg0, %c0_i32, %c0_i32_0 : i32, i32, i32
  }
  func.func @transform_2(%arg0: i32) -> (i32, i32, i32) {
    %c0_i32 = arith.constant 0 : i32
    %c0_i32_0 = arith.constant 0 : i32
    %c0_i32_1 = arith.constant 0 : i32
    return %arg0, %c0_i32, %c0_i32_0 : i32, i32, i32
  }
  func.func @transform_3(%arg0: i32) -> (i32, i32) {
    %c0_i32 = arith.constant 0 : i32
    %c0_i32_0 = arith.constant 0 : i32
    %c0_i32_1 = arith.constant 0 : i32
    return %c0_i32, %c0_i32_0 : i32, i32
  }
  func.func @transform_4(%arg0: i32) -> (i32, i32) {
    %c0_i32 = arith.constant 0 : i32
    %c0_i32_0 = arith.constant 0 : i32
    %c0_i32_1 = arith.constant 0 : i32
    return %c0_i32, %c0_i32_0 : i32, i32
  }
  func.func @transform_5(%arg0: i32) -> (i32, i32) {
    %c0_i32 = arith.constant 0 : i32
    %c0_i32_0 = arith.constant 0 : i32
    %c0_i32_1 = arith.constant 0 : i32
    return %c0_i32, %c0_i32_0 : i32, i32
  }
  func.func @transform_6(%arg0: i32) -> (i32, i32, i32) {
    %c0_i32 = arith.constant 0 : i32
    %c0_i32_0 = arith.constant 0 : i32
    %c0_i32_1 = arith.constant 0 : i32
    return %arg0, %c0_i32, %c0_i32_0 : i32, i32, i32
  }
  func.func @transform_7(%arg0: i32) -> (i32, i32, i32) {
    %c0_i32 = arith.constant 0 : i32
    %c0_i32_0 = arith.constant 0 : i32
    %c0_i32_1 = arith.constant 0 : i32
    return %arg0, %c0_i32, %c0_i32_0 : i32, i32, i32
  }
}

</mosaic_0001>

<llo_original>
// kernel: attention_forward.1
$region0: #{attention_forward.1}
  #allocation0 [shape = 'u32[]', space=smem, size = 0x4, offset = 0x4, fixed_abs, tag = 'smem constant byte address 0x4 - core index']
  #allocation1 [shape = 'u32[144,128]{1,0:T(1,128)}', space=vmem, size = 0x12000, scoped, tag = 'internal scratch']
  %s0 = inlined_call_operand.vmem [shape: f32[2,10,8], index: 0, kind: input, shape index: {}]
  %s1 = inlined_call_operand.vmem [shape: f32[2,1,4], index: 1, kind: input, shape index: {}]
  %s2 = inlined_call_operand.vmem [shape: f32[2,1,4], index: 2, kind: input, shape index: {}]
  %s3 = inlined_call_operand.vmem [shape: f32[8,16], index: 3, kind: input, shape index: {}]
  %s4 = inlined_call_operand.vmem [shape: f32[4,16], index: 4, kind: input, shape index: {}]
  %s5 = inlined_call_operand.vmem [shape: f32[1,16], index: 5, kind: input, shape index: {}]
  %s6 = inlined_call_operand.vmem [shape: f32[2,10,4], index: 6, kind: input, shape index: {}]
  %s7 = inlined_call_operand.vmem [shape: f32[2,10,8], index: 7, kind: output, shape index: {}]
  %s8 = sld [smem:[#allocation0]]
  $region61: #{attention_forward.1} parent=0
    _
  %s10 = ssub.s32 1, %s8
  %s11 = scalar_select 0, %s10, %s8
  loop: start=0, step=1, limit=4
  $region2: #{attention_forward.1} parent=0 // loop_pre_header
    _
  $region3: #{attention_forward.1} parent=0 // loop_header
    %s13 = sphi 0, %s17
    %p14 = scmp.ge.s32.totalorder %s13, 4
    %s23 = sphi 0, %s25
    %s26 = sphi 0, %s23
    %s27 = sphi 0, %s26
    %s43 = sphi 0, %s27
    %s49 = sphi 0, %s51
    %s52 = sphi 0, %s49
    %s53 = sphi 0, %s52
    %s69 = sphi 0, %s53
    %s75 = sphi 0, %s77
    %s78 = sphi 0, %s75
    %s79 = sphi 0, %s78
    %s95 = sphi 0, %s79
    %s99 = sphi 0, %s99
    %s101 = sphi 0, %s99
    %s102 = sphi 0, %s101
    %s116 = sphi 0, %s102
    %s120 = sphi 0, %s120
    %s122 = sphi 0, %s120
    %s123 = sphi 0, %s122
    %s137 = sphi 0, %s123
    %s141 = sphi 0, %s141
    %s143 = sphi 0, %s141
    %s144 = sphi 0, %s143
    %s158 = sphi 0, %s144
    %s164 = sphi 0, %s166
    %s167 = sphi 0, %s164
    %s168 = sphi 0, %s167
    %s184 = sphi 0, %s168
    %s190 = sphi 0, %s192
    %s193 = sphi 0, %s190
    %s194 = sphi 0, %s193
    %s210 = sphi 0, %s194
  $region4: #{attention_forward.1} parent=0 // loop_header_branch
    %16 = sbr.rel (%p14) target = $region8
  $region5: #{attention_forward.1} parent=0 // loop_body
    %s18 = ssub.s32 %s13, 1
    %s19 = ssub.s32 %s13, 2
    %s20 = sadd.s32 %s13, 1
    %s21 = ssub.s32 %s13, %s20
    %p22 = scmp.eq.s32.totalorder %s21, 0
    %s24 = sadd.s32 %s23, 1
    %s25 = scalar_select %p22, %s23, %s24
    %p28 = pneg %p22
    %p29 = scmp.eq.s32.totalorder %s13, 1
    %p30 = por %p28, %p29
    %p31 = scmp.ne.s32.totalorder %s23, %s26
    %p32 = scmp.eq.s32.totalorder %s13, 0
    %p33 = por %p31, %p32
    %p34 = scmp.ne.s32.totalorder %s23, %s26
    %p35 = scmp.eq.s32.totalorder %s18, 1
    %p36 = por %p34, %p35
    %p37 = scmp.ne.s32.totalorder %s26, %s27
    %p38 = scmp.eq.s32.totalorder %s18, 0
    %p39 = por %p37, %p38
    %p40 = scmp.ne.s32.totalorder %s26, %s27
    %p41 = scmp.eq.s32.totalorder %s19, 1
    %p42 = por %p40, %p41
    %p44 = scmp.ne.s32.totalorder %s27, %s43
    %p45 = scmp.eq.s32.totalorder %s19, 0
    %p46 = por %p44, %p45
    %s47 = ssub.s32 %s13, %s20
    %p48 = scmp.eq.s32.totalorder %s47, 0
    %s50 = sadd.s32 %s49, 1
    %s51 = scalar_select %p48, %s49, %s50
    %p54 = pneg %p48
    %p55 = scmp.eq.s32.totalorder %s13, 1
    %p56 = por %p54, %p55
    %p57 = scmp.ne.s32.totalorder %s49, %s52
    %p58 = scmp.eq.s32.totalorder %s13, 0
    %p59 = por %p57, %p58
    %p60 = scmp.ne.s32.totalorder %s49, %s52
    %p61 = scmp.eq.s32.totalorder %s18, 1
    %p62 = por %p60, %p61
    %p63 = scmp.ne.s32.totalorder %s52, %s53
    %p64 = scmp.eq.s32.totalorder %s18, 0
    %p65 = por %p63, %p64
    %p66 = scmp.ne.s32.totalorder %s52, %s53
    %p67 = scmp.eq.s32.totalorder %s19, 1
    %p68 = por %p66, %p67
    %p70 = scmp.ne.s32.totalorder %s53, %s69
    %p71 = scmp.eq.s32.totalorder %s19, 0
    %p72 = por %p70, %p71
    %s73 = ssub.s32 %s13, %s20
    %p74 = scmp.eq.s32.totalorder %s73, 0
    %s76 = sadd.s32 %s75, 1
    %s77 = scalar_select %p74, %s75, %s76
    %p80 = pneg %p74
    %p81 = scmp.eq.s32.totalorder %s13, 1
    %p82 = por %p80, %p81
    %p83 = scmp.ne.s32.totalorder %s75, %s78
    %p84 = scmp.eq.s32.totalorder %s13, 0
    %p85 = por %p83, %p84
    %p86 = scmp.ne.s32.totalorder %s75, %s78
    %p87 = scmp.eq.s32.totalorder %s18, 1
    %p88 = por %p86, %p87
    %p89 = scmp.ne.s32.totalorder %s78, %s79
    %p90 = scmp.eq.s32.totalorder %s18, 0
    %p91 = por %p89, %p90
    %p92 = scmp.ne.s32.totalorder %s78, %s79
    %p93 = scmp.eq.s32.totalorder %s19, 1
    %p94 = por %p92, %p93
    %p96 = scmp.ne.s32.totalorder %s79, %s95
    %p97 = scmp.eq.s32.totalorder %s19, 0
    %p98 = por %p96, %p97
    %s100 = sadd.s32 %s99, 1
    %p103 = scmp.eq.s32.totalorder %s13, 1
    %p104 = scmp.ne.s32.totalorder %s99, %s101
    %p105 = scmp.eq.s32.totalorder %s13, 0
    %p106 = por %p104, %p105
    %p107 = scmp.ne.s32.totalorder %s99, %s101
    %p108 = scmp.eq.s32.totalorder %s18, 1
    %p109 = por %p107, %p108
    %p110 = scmp.ne.s32.totalorder %s101, %s102
    %p111 = scmp.eq.s32.totalorder %s18, 0
    %p112 = por %p110, %p111
    %p113 = scmp.ne.s32.totalorder %s101, %s102
    %p114 = scmp.eq.s32.totalorder %s19, 1
    %p115 = por %p113, %p114
    %p117 = scmp.ne.s32.totalorder %s102, %s116
    %p118 = scmp.eq.s32.totalorder %s19, 0
    %p119 = por %p117, %p118
    %s121 = sadd.s32 %s120, 1
    %p124 = scmp.eq.s32.totalorder %s13, 1
    %p125 = scmp.ne.s32.totalorder %s120, %s122
    %p126 = scmp.eq.s32.totalorder %s13, 0
    %p127 = por %p125, %p126
    %p128 = scmp.ne.s32.totalorder %s120, %s122
    %p129 = scmp.eq.s32.totalorder %s18, 1
    %p130 = por %p128, %p129
    %p131 = scmp.ne.s32.totalorder %s122, %s123
    %p132 = scmp.eq.s32.totalorder %s18, 0
    %p133 = por %p131, %p132
    %p134 = scmp.ne.s32.totalorder %s122, %s123
    %p135 = scmp.eq.s32.totalorder %s19, 1
    %p136 = por %p134, %p135
    %p138 = scmp.ne.s32.totalorder %s123, %s137
    %p139 = scmp.eq.s32.totalorder %s19, 0
    %p140 = por %p138, %p139
    %s142 = sadd.s32 %s141, 1
    %p145 = scmp.eq.s32.totalorder %s13, 1
    %p146 = scmp.ne.s32.totalorder %s141, %s143
    %p147 = scmp.eq.s32.totalorder %s13, 0
    %p148 = por %p146, %p147
    %p149 = scmp.ne.s32.totalorder %s141, %s143
    %p150 = scmp.eq.s32.totalorder %s18, 1
    %p151 = por %p149, %p150
    %p152 = scmp.ne.s32.totalorder %s143, %s144
    %p153 = scmp.eq.s32.totalorder %s18, 0
    %p154 = por %p152, %p153
    %p155 = scmp.ne.s32.totalorder %s143, %s144
    %p156 = scmp.eq.s32.totalorder %s19, 1
    %p157 = por %p155, %p156
    %p159 = scmp.ne.s32.totalorder %s144, %s158
    %p160 = scmp.eq.s32.totalorder %s19, 0
    %p161 = por %p159, %p160
    %s162 = ssub.s32 %s13, %s20
    %p163 = scmp.eq.s32.totalorder %s162, 0
    %s165 = sadd.s32 %s164, 1
    %s166 = scalar_select %p163, %s164, %s165
    %p169 = pneg %p163
    %p170 = scmp.eq.s32.totalorder %s13, 1
    %p171 = por %p169, %p170
    %p172 = scmp.ne.s32.totalorder %s164, %s167
    %p173 = scmp.eq.s32.totalorder %s13, 0
    %p174 = por %p172, %p173
    %p175 = scmp.ne.s32.totalorder %s164, %s167
    %p176 = scmp.eq.s32.totalorder %s18, 1
    %p177 = por %p175, %p176
    %p178 = scmp.ne.s32.totalorder %s167, %s168
    %p179 = scmp.eq.s32.totalorder %s18, 0
    %p180 = por %p178, %p179
    %p181 = scmp.ne.s32.totalorder %s167, %s168
    %p182 = scmp.eq.s32.totalorder %s19, 1
    %p183 = por %p181, %p182
    %p185 = scmp.ne.s32.totalorder %s168, %s184
    %p186 = scmp.eq.s32.totalorder %s19, 0
    %p187 = por %p185, %p186
    %s188 = ssub.s32 %s13, %s20
    %p189 = scmp.eq.s32.totalorder %s188, 0
    %s191 = sadd.s32 %s190, 1
    %s192 = scalar_select %p189, %s190, %s191
    %p195 = pneg %p189
    %p196 = scmp.eq.s32.totalorder %s13, 1
    %p197 = por %p195, %p196
    %p198 = scmp.ne.s32.totalorder %s190, %s193
    %p199 = scmp.eq.s32.totalorder %s13, 0
    %p200 = por %p198, %p199
    %p201 = scmp.ne.s32.totalorder %s190, %s193
    %p202 = scmp.eq.s32.totalorder %s18, 1
    %p203 = por %p201, %p202
    %p204 = scmp.ne.s32.totalorder %s193, %s194
    %p205 = scmp.eq.s32.totalorder %s18, 0
    %p206 = por %p204, %p205
    %p207 = scmp.ne.s32.totalorder %s193, %s194
    %p208 = scmp.eq.s32.totalorder %s19, 1
    %p209 = por %p207, %p208
    %p211 = scmp.ne.s32.totalorder %s194, %s210
    %p212 = scmp.eq.s32.totalorder %s19, 0
    %p213 = por %p211, %p212
    %p214 = scmp.le.s32.totalorder 1, %s13
    %p215 = scmp.lt.s32.totalorder %s13, 3
    %p216 = pnand %p214, %p215
    %p217 = pneg %p216
    // Predicated region
    $region9: #{attention_forward.1} parent=5 // pred_check
      _
    $region10: #{attention_forward.1} parent=5 // pred_check_branch
      %219 = sbr.rel (%p216) target = $region12
    $region11: #{attention_forward.1} parent=5 // pred_region
      %s220 = ssub.s32 %s13, 1
      // Predicated region
      $region13: #{attention_forward.1} parent=11 // pred_check
        %p221 = pneg %p112
      $region14: #{attention_forward.1} parent=11 // pred_check_branch
        %223 = sbr.rel (%p221) target = $region16
      $region15: #{attention_forward.1} parent=11 // pred_region
        _
      $region16: #{attention_forward.1} parent=11 // pred_fallthru
        _
      // Predicated region
      $region17: #{attention_forward.1} parent=11 // pred_check
        %p224 = pneg %p133
      $region18: #{attention_forward.1} parent=11 // pred_check_branch
        %226 = sbr.rel (%p224) target = $region20
      $region19: #{attention_forward.1} parent=11 // pred_region
        _
      $region20: #{attention_forward.1} parent=11 // pred_fallthru
        _
      // Predicated region
      $region21: #{attention_forward.1} parent=11 // pred_check
        %p227 = pneg %p154
      $region22: #{attention_forward.1} parent=11 // pred_check_branch
        %229 = sbr.rel (%p227) target = $region24
      $region23: #{attention_forward.1} parent=11 // pred_region
        _
      $region24: #{attention_forward.1} parent=11 // pred_fallthru
        _
    $region12: #{attention_forward.1} parent=5 // pred_fallthru
      _
    %p230 = scmp.lt.s32.totalorder %s13, 2
    // Predicated region
    $region25: #{attention_forward.1} parent=5 // pred_check
      %p231 = pneg %p230
    $region26: #{attention_forward.1} parent=5 // pred_check_branch
      %233 = sbr.rel (%p231) target = $region28
    $region27: #{attention_forward.1} parent=5 // pred_region
      // Predicated region
      $region29: #{attention_forward.1} parent=27 // pred_check
        %p234 = pneg %p33
      $region30: #{attention_forward.1} parent=27 // pred_check_branch
        %236 = sbr.rel (%p234) target = $region32
      $region31: #{attention_forward.1} parent=27 // pred_region
        %p237 = scmp.lt.s32.totalorder %s13, 1
        %s238 = scalar_select %p237, %s13, 1
        %s239 = smul.addr %s238, 2
        %s240 = smul.addr %s239, 8
        %s241 = scalar_lea.vmem %s0, %s240
      $region32: #{attention_forward.1} parent=27 // pred_fallthru
        _
      // Predicated region
      $region33: #{attention_forward.1} parent=27 // pred_check
        %p242 = pneg %p59
      $region34: #{attention_forward.1} parent=27 // pred_check_branch
        %244 = sbr.rel (%p242) target = $region36
      $region35: #{attention_forward.1} parent=27 // pred_region
        %p245 = scmp.lt.s32.totalorder %s13, 1
        %s246 = scalar_select %p245, %s13, 1
        %s247 = scalar_lea.vmem %s1, %s246
      $region36: #{attention_forward.1} parent=27 // pred_fallthru
        _
      // Predicated region
      $region37: #{attention_forward.1} parent=27 // pred_check
        %p248 = pneg %p85
      $region38: #{attention_forward.1} parent=27 // pred_check_branch
        %250 = sbr.rel (%p248) target = $region40
      $region39: #{attention_forward.1} parent=27 // pred_region
        %p251 = scmp.lt.s32.totalorder %s13, 1
        %s252 = scalar_select %p251, %s13, 1
        %s253 = scalar_lea.vmem %s2, %s252
      $region40: #{attention_forward.1} parent=27 // pred_fallthru
        _
      // Predicated region
      $region41: #{attention_forward.1} parent=27 // pred_check
        %p254 = pneg %p174
      $region42: #{attention_forward.1} parent=27 // pred_check_branch
        %256 = sbr.rel (%p254) target = $region44
      $region43: #{attention_forward.1} parent=27 // pred_region
        %p257 = scmp.lt.s32.totalorder %s13, 1
        %s258 = scalar_select %p257, %s13, 1
        %s259 = smul.addr %s258, 2
        %s260 = smul.addr %s259, 8
        %s261 = scalar_lea.vmem %s6, %s260
      $region44: #{attention_forward.1} parent=27 // pred_fallthru
        _
    $region28: #{attention_forward.1} parent=5 // pred_fallthru
      _
    %p262 = scmp.le.s32.totalorder 1, %s13
    %p263 = scmp.lt.s32.totalorder %s13, 3
    %p264 = pnand %p262, %p263
    %p265 = pneg %p264
    // Predicated region
    $region45: #{attention_forward.1} parent=5 // pred_check
      _
    $region46: #{attention_forward.1} parent=5 // pred_check_branch
      %267 = sbr.rel (%p264) target = $region48
    $region47: #{attention_forward.1} parent=5 // pred_region
      %s268 = ssub.s32 %s13, 1
      %p269 = scmp.lt.s32.totalorder %s18, 1
      %s270 = scalar_select %p269, %s18, 1
      %s271 = smul.addr %s270, 2
      %s272 = smul.addr %s271, 8
      %s273 = scalar_lea.vmem %s0, %s272
      %p274 = pneg %p39
      %p275 = pneg %p36
      %p276 = scmp.lt.s32.totalorder %s18, 1
      %s277 = scalar_select %p276, %s18, 1
      %s278 = scalar_lea.vmem %s1, %s277
      %p279 = pneg %p65
      %p280 = pneg %p62
      %p281 = scmp.lt.s32.totalorder %s18, 1
      %s282 = scalar_select %p281, %s18, 1
      %s283 = scalar_lea.vmem %s2, %s282
      %p284 = pneg %p91
      %p285 = pneg %p88
      %p286 = pneg %p112
      %p287 = pneg %p109
      %p288 = pneg %p133
      %p289 = pneg %p130
      %p290 = pneg %p154
      %p291 = pneg %p151
      %p292 = scmp.lt.s32.totalorder %s18, 1
      %s293 = scalar_select %p292, %s18, 1
      %s294 = smul.addr %s293, 2
      %s295 = smul.addr %s294, 8
      %s296 = scalar_lea.vmem %s6, %s295
      %p297 = pneg %p180
      %p298 = pneg %p177
      %p299 = pneg %p206
      %p300 = pneg %p203
      %p301 = scmp.lt.s32.totalorder %s18, 1
      %s302 = scalar_select %p301, %s18, 1
      %s303 = smul.addr %s302, 2
      %s304 = smul.addr %s303, 8
      %s305 = scalar_lea.vmem %s7, %s304
      %p306 = scmp.lt.s32.totalorder %s18, 1
      %s307 = scalar_select %p306, %s18, 1
      %s308 = smul.addr %s307, 2
      %s309 = smul.addr %s308, 8
      %s310 = scalar_lea.vmem %s0, %s309
      %p311 = scmp.lt.s32.totalorder %s18, 1
      %s312 = scalar_select %p311, %s18, 1
      %s313 = scalar_lea.vmem %s1, %s312
      %p314 = scmp.lt.s32.totalorder %s18, 1
      %s315 = scalar_select %p314, %s18, 1
      %s316 = scalar_lea.vmem %s2, %s315
      %p317 = scmp.lt.s32.totalorder %s18, 1
      %s318 = scalar_select %p317, %s18, 1
      %s319 = smul.addr %s318, 2
      %s320 = smul.addr %s319, 8
      %s321 = scalar_lea.vmem %s6, %s320
      %p322 = scmp.lt.s32.totalorder %s18, 1
      %s323 = scalar_select %p322, %s18, 1
      %s324 = smul.addr %s323, 2
      %s325 = smul.addr %s324, 8
      %s326 = scalar_lea.vmem %s7, %s325
      %v327 = vld [vmem:[%s310] sm:$0xff]
      %v328 = vld [vmem:[%s310 + $0x8] sm:$0x3]
      %v329 = vld [vmem:[%s3] sm:$0xff]
      %v330 = vld [vmem:[%s5] sm:$0x1]
      %v332 = vlaneseq
      %v333 = vshrl.u32 %v332, 7
      %v334 = vsub.s32 0, %v333
      %v335 = vrot.slane %v330, %v334
      %vm337 = vcmask 64512
      %v339 = vsel %vm337, %v327, 0
      %v342 = vsel %vm337, %v328, 0
      %344 = vmatprep.subr.mxu0 0.0
      %345 = vmatpush1.msra.mxu0 0.0
      %346 = vmatprep.subr.mxu0 0.0
      %347 = vmatpush1.msra.mxu0 0.0
      %348 = vmatprep.subr.mxu0 0.0
      %349 = vmatpush1.msra.mxu0 0.0
      %350 = vmatprep.subr.mxu0 0.0
      %351 = vmatpush1.msra.mxu0 0.0
      %352 = vmatprep.subr.mxu0 0.0
      %353 = vmatpush1.msra.mxu0 0.0
      %354 = vmatprep.subr.mxu0 0.0
      %355 = vmatpush1.msra.mxu0 0.0
      %356 = vmatprep.subr.mxu0 0.0
      %357 = vmatpush1.msra.mxu0 0.0
      %358 = vmatprep.subr.mxu0 0.0
      %359 = vmatpush1.msra.mxu0 0.0
      %360 = vmatprep.subr.mxu0 0.0
      %361 = vmatpush1.msra.mxu0 0.0
      %362 = vmatprep.subr.mxu0 0.0
      %363 = vmatpush1.msra.mxu0 0.0
      %364 = vmatprep.subr.mxu0 0.0
      %365 = vmatpush1.msra.mxu0 0.0
      %366 = vmatprep.subr.mxu0 0.0
      %367 = vmatpush1.msra.mxu0 0.0
      %368 = vmatprep.subr.mxu0 0.0
      %369 = vmatpush1.msra.mxu0 0.0
      %370 = vmatprep.subr.mxu0 0.0
      %371 = vmatpush1.msra.mxu0 0.0
      %372 = vmatprep.subr.mxu0 0.0
      %373 = vmatpush1.msra.mxu0 0.0
      %374 = vmatprep.subr.mxu0 0.0
      %375 = vmatpush1.msra.mxu0 %v329
      %376 = vmatprep.subr.mxu0 0.0
      %377 = vmatpush2.msra.mxu0 0.0
      %378 = vmatprep.subr.mxu0 0.0
      %379 = vmatpush2.msra.mxu0 0.0
      %380 = vmatprep.subr.mxu0 0.0
      %381 = vmatpush2.msra.mxu0 0.0
      %382 = vmatprep.subr.mxu0 0.0
      %383 = vmatpush2.msra.mxu0 0.0
      %384 = vmatprep.subr.mxu0 0.0
      %385 = vmatpush2.msra.mxu0 0.0
      %386 = vmatprep.subr.mxu0 0.0
      %387 = vmatpush2.msra.mxu0 0.0
      %388 = vmatprep.subr.mxu0 0.0
      %389 = vmatpush2.msra.mxu0 0.0
      %390 = vmatprep.subr.mxu0 0.0
      %391 = vmatpush2.msra.mxu0 0.0
      %392 = vmatprep.subr.mxu0 0.0
      %393 = vmatpush2.msra.mxu0 0.0
      %394 = vmatprep.subr.mxu0 0.0
      %395 = vmatpush2.msra.mxu0 0.0
      %396 = vmatprep.subr.mxu0 0.0
      %397 = vmatpush2.msra.mxu0 0.0
      %398 = vmatprep.subr.mxu0 0.0
      %399 = vmatpush2.msra.mxu0 0.0
      %400 = vmatprep.subr.mxu0 0.0
      %401 = vmatpush2.msra.mxu0 0.0
      %402 = vmatprep.subr.mxu0 0.0
      %403 = vmatpush2.msra.mxu0 0.0
      %404 = vmatprep.subr.mxu0 0.0
      %405 = vmatpush2.msra.mxu0 0.0
      %406 = vmatprep.subr.mxu0 0.0
      %407 = vmatpush2.msra.mxu0 0.0
      %408 = vmatprep.mubr.f32.mxu0 0.0
      %409 = vmatmul.mubr.f32.gmra.mxu0 %v339
      %v410 = vpop.f32.mrf.mxu0
      %v411 = vadd.f32 %v335, %v410
      %v412 = vpop.f32.mrf.mxu0
      %413 = vmatprep.mubr.f32.mxu0 0.0
      %414 = vmatmul.mubr.f32.gmra.mxu0 %v342
      %v415 = vpop.f32.mrf.mxu0
      %v416 = vadd.f32 %v335, %v415
      %v417 = vpop.f32.mrf.mxu0
      %418 = vdwg.mxu0
      %v419 = vld [vmem:[%s4] sm:$0xf]
      %v420 = vld [vmem:[%s313] sm:$0x1]
      %v421 = vld [vmem:[%s316] sm:$0x1]
      %423 = vset.pattern.permute.xlu0 0
      %424 = vperm.xlu0 %423, %v420
      %v425 = vpop.permute.xlu0 %424
      %v427 = vlaneseq
      %v428 = vshrl.u32 %v427, 7
      %v429 = vsub.s32 0, %v428
      %v430 = vrot.slane %v425, %v429
      %v431 = vmul.f32 %v430, %v419
      %432 = vset.pattern.permute.xlu0 1
      %433 = vperm.xlu0 %432, %v420
      %v434 = vpop.permute.xlu0 %433
      %v436 = vlaneseq
      %v437 = vshrl.u32 %v436, 7
      %v438 = vsub.s32 0, %v437
      %v439 = vrot.slane %v434, %v438
      %v440 = vmul.f32 %v439, %v419
      %v442 = vrot.slane %v440, 1
      %v444 = vadd.f32 %v431, %v442
      %445 = vset.pattern.permute.xlu0 2
      %446 = vperm.xlu0 %445, %v420
      %v447 = vpop.permute.xlu0 %446
      %v449 = vlaneseq
      %v450 = vshrl.u32 %v449, 7
      %v451 = vsub.s32 0, %v450
      %v452 = vrot.slane %v447, %v451
      %v453 = vmul.f32 %v452, %v419
      %454 = vset.pattern.permute.xlu0 3
      %455 = vperm.xlu0 %454, %v420
      %v456 = vpop.permute.xlu0 %455
      %v458 = vlaneseq
      %v459 = vshrl.u32 %v458, 7
      %v460 = vsub.s32 0, %v459
      %v461 = vrot.slane %v456, %v460
      %v462 = vmul.f32 %v461, %v419
      %v464 = vrot.slane %v462, 1
      %v466 = vadd.f32 %v453, %v464
      %v468 = vrot.slane %v466, 2
      %v470 = vadd.f32 %v444, %v468
      %v471 = vadd.f32 %v411, %v470
      %v472 = vxor.u32 %v471, 2147483648
      %v473 = vmul.f32 %v472, 1.442695
      %v474 = vpow.pop %v473
      %v475 = vadd.f32 %v474, 1.0
      %v476 = vrcp.pop %v475
      %v477 = vmul.f32 1.0, %v476
      %v478 = vmul.f32 %v477, 2.0
      %v479 = vsub.f32 %v478, 1.0
      %v481 = vlaneseq
      %v482 = vshrl.u32 %v481, 7
      %v483 = vsub.s32 0, %v482
      %v484 = vrot.slane %v421, %v483
      %485 = vrot.lane.b32.xlu0 %v484, 4
      %v486 = vpop.permute.xlu0 %485
      %v488 = vmul.f32 %v477, %v486
      %490 = vrot.lane.b32.xlu0 %v479, 120
      %v491 = vpop.permute.xlu0 %490
      %v493 = vmul.f32 %v477, %v491
      %495 = vrot.lane.b32.xlu0 %v493, 4
      %v496 = vpop.permute.xlu0 %495
      %v498 = vadd.f32 %v488, %v496
      %v499 = vtanh.pop %v498
      %501 = vrot.lane.b32.xlu0 %v499, 8
      %v502 = vpop.permute.xlu0 %501
      %v504 = vmul.f32 %v477, %v502
      %506 = vrot.lane.b32.xlu0 %v504, 120
      %v507 = vpop.permute.xlu0 %506
      %vm509 = vcmask 57376
      %510 = vst.msk [vmem:[%s326] sm:$0x1] %vm509, %v507
      %511 = vset.pattern.permute.xlu0 12
      %512 = vperm.xlu0 %511, %v504
      %v513 = vpop.permute.xlu0 %512
      %v515 = vmul.f32 %v513, %v419
      %516 = vset.pattern.permute.xlu0 13
      %517 = vperm.xlu0 %516, %v504
      %v518 = vpop.permute.xlu0 %517
      %v521 = vrot.slane %v419, 1
      %v523 = vmul.f32 %v518, %v521
      %v524 = vadd.f32 %v515, %v523
      %525 = vset.pattern.permute.xlu0 14
      %526 = vperm.xlu0 %525, %v504
      %v527 = vpop.permute.xlu0 %526
      %v529 = vrot.slane %v419, 2
      %v531 = vmul.f32 %v527, %v529
      %532 = vset.pattern.permute.xlu0 15
      %533 = vperm.xlu0 %532, %v504
      %v534 = vpop.permute.xlu0 %533
      %v536 = vrot.slane %v419, 3
      %v538 = vmul.f32 %v534, %v536
      %v539 = vadd.f32 %v531, %v538
      %v540 = vadd.f32 %v524, %v539
      %v542 = vrot.slane %v540, 7
      %v544 = vadd.f32 %v411, %v542
      %v545 = vxor.u32 %v544, 2147483648
      %v546 = vmul.f32 %v545, 1.442695
      %v547 = vpow.pop %v546
      %v548 = vadd.f32 %v547, 1.0
      %v549 = vrcp.pop %v548
      %v550 = vmul.f32 1.0, %v549
      %v551 = vmul.f32 %v550, 2.0
      %v552 = vsub.f32 %v551, 1.0
      %v554 = vrot.slane %v498, 7
      %v556 = vmul.f32 %v550, %v554
      %558 = vrot.lane.b32.xlu0 %v552, 120
      %v559 = vpop.permute.xlu0 %558
      %v561 = vmul.f32 %v550, %v559
      %563 = vrot.lane.b32.xlu0 %v561, 4
      %v564 = vpop.permute.xlu0 %563
      %v566 = vadd.f32 %v556, %v564
      %v567 = vtanh.pop %v566
      %569 = vrot.lane.b32.xlu0 %v567, 8
      %v570 = vpop.permute.xlu0 %569
      %v572 = vmul.f32 %v550, %v570
      %574 = vrot.lane.b32.xlu0 %v572, 120
      %v575 = vpop.permute.xlu0 %574
      %vm577 = vcmask 58401
      %578 = vst.msk [vmem:[%s326] sm:$0x2] %vm577, %v575
      %579 = vset.pattern.permute.xlu0 12
      %580 = vperm.xlu0 %579, %v572
      %v581 = vpop.permute.xlu0 %580
      %v583 = vrot.slane %v419, 7
      %v585 = vmul.f32 %v581, %v583
      %586 = vset.pattern.permute.xlu0 13
      %587 = vperm.xlu0 %586, %v572
      %v588 = vpop.permute.xlu0 %587
      %v590 = vmul.f32 %v588, %v419
      %v591 = vadd.f32 %v585, %v590
      %592 = vset.pattern.permute.xlu0 14
      %593 = vperm.xlu0 %592, %v572
      %v594 = vpop.permute.xlu0 %593
      %v596 = vmul.f32 %v594, %v521
      %597 = vset.pattern.permute.xlu0 15
      %598 = vperm.xlu0 %597, %v572
      %v599 = vpop.permute.xlu0 %598
      %v601 = vmul.f32 %v599, %v529
      %v602 = vadd.f32 %v596, %v601
      %v603 = vadd.f32 %v591, %v602
      %v605 = vrot.slane %v603, 7
      %v607 = vadd.f32 %v411, %v605
      %v608 = vxor.u32 %v607, 2147483648
      %v609 = vmul.f32 %v608, 1.442695
      %v610 = vpow.pop %v609
      %v611 = vadd.f32 %v610, 1.0
      %v612 = vrcp.pop %v611
      %v613 = vmul.f32 1.0, %v612
      %v614 = vmul.f32 %v613, 2.0
      %v615 = vsub.f32 %v614, 1.0
      %v617 = vrot.slane %v566, 7
      %v619 = vmul.f32 %v613, %v617
      %621 = vrot.lane.b32.xlu0 %v615, 120
      %v622 = vpop.permute.xlu0 %621
      %v624 = vmul.f32 %v613, %v622
      %626 = vrot.lane.b32.xlu0 %v624, 4
      %v627 = vpop.permute.xlu0 %626
      %v629 = vadd.f32 %v619, %v627
      %v630 = vtanh.pop %v629
      %632 = vrot.lane.b32.xlu0 %v630, 8
      %v633 = vpop.permute.xlu0 %632
      %v635 = vmul.f32 %v613, %v633
      %637 = vrot.lane.b32.xlu0 %v635, 120
      %v638 = vpop.permute.xlu0 %637
      %vm640 = vcmask 59426
      %641 = vst.msk [vmem:[%s326] sm:$0x4] %vm640, %v638
      %642 = vset.pattern.permute.xlu0 12
      %643 = vperm.xlu0 %642, %v635
      %v644 = vpop.permute.xlu0 %643
      %v646 = vrot.slane %v419, 6
      %v648 = vmul.f32 %v644, %v646
      %649 = vset.pattern.permute.xlu0 13
      %650 = vperm.xlu0 %649, %v635
      %v651 = vpop.permute.xlu0 %650
      %v653 = vmul.f32 %v651, %v583
      %v654 = vadd.f32 %v648, %v653
      %655 = vset.pattern.permute.xlu0 14
      %656 = vperm.xlu0 %655, %v635
      %v657 = vpop.permute.xlu0 %656
      %v659 = vmul.f32 %v657, %v419
      %660 = vset.pattern.permute.xlu0 15
      %661 = vperm.xlu0 %660, %v635
      %v662 = vpop.permute.xlu0 %661
      %v664 = vmul.f32 %v662, %v521
      %v665 = vadd.f32 %v659, %v664
      %v666 = vadd.f32 %v654, %v665
      %v668 = vrot.slane %v666, 7
      %v670 = vadd.f32 %v411, %v668
      %v671 = vxor.u32 %v670, 2147483648
      %v672 = vmul.f32 %v671, 1.442695
      %v673 = vpow.pop %v672
      %v674 = vadd.f32 %v673, 1.0
      %v675 = vrcp.pop %v674
      %v676 = vmul.f32 1.0, %v675
      %v677 = vmul.f32 %v676, 2.0
      %v678 = vsub.f32 %v677, 1.0
      %v680 = vrot.slane %v629, 7
      %v682 = vmul.f32 %v676, %v680
      %684 = vrot.lane.b32.xlu0 %v678, 120
      %v685 = vpop.permute.xlu0 %684
      %v687 = vmul.f32 %v676, %v685
      %689 = vrot.lane.b32.xlu0 %v687, 4
      %v690 = vpop.permute.xlu0 %689
      %v692 = vadd.f32 %v682, %v690
      %v693 = vtanh.pop %v692
      %695 = vrot.lane.b32.xlu0 %v693, 8
      %v696 = vpop.permute.xlu0 %695
      %v698 = vmul.f32 %v676, %v696
      %700 = vrot.lane.b32.xlu0 %v698, 120
      %v701 = vpop.permute.xlu0 %700
      %vm703 = vcmask 60451
      %704 = vst.msk [vmem:[%s326] sm:$0x8] %vm703, %v701
      %705 = vset.pattern.permute.xlu0 12
      %706 = vperm.xlu0 %705, %v698
      %v707 = vpop.permute.xlu0 %706
      %v709 = vrot.slane %v419, 5
      %v711 = vmul.f32 %v707, %v709
      %712 = vset.pattern.permute.xlu0 13
      %713 = vperm.xlu0 %712, %v698
      %v714 = vpop.permute.xlu0 %713
      %v716 = vmul.f32 %v714, %v646
      %v717 = vadd.f32 %v711, %v716
      %718 = vset.pattern.permute.xlu0 14
      %719 = vperm.xlu0 %718, %v698
      %v720 = vpop.permute.xlu0 %719
      %v722 = vmul.f32 %v720, %v583
      %723 = vset.pattern.permute.xlu0 15
      %724 = vperm.xlu0 %723, %v698
      %v725 = vpop.permute.xlu0 %724
      %v727 = vmul.f32 %v725, %v419
      %v728 = vadd.f32 %v722, %v727
      %v729 = vadd.f32 %v717, %v728
      %v731 = vrot.slane %v729, 7
      %v733 = vadd.f32 %v411, %v731
      %v734 = vxor.u32 %v733, 2147483648
      %v735 = vmul.f32 %v734, 1.442695
      %v736 = vpow.pop %v735
      %v737 = vadd.f32 %v736, 1.0
      %v738 = vrcp.pop %v737
      %v739 = vmul.f32 1.0, %v738
      %v740 = vmul.f32 %v739, 2.0
      %v741 = vsub.f32 %v740, 1.0
      %v743 = vrot.slane %v692, 7
      %v745 = vmul.f32 %v739, %v743
      %747 = vrot.lane.b32.xlu0 %v741, 120
      %v748 = vpop.permute.xlu0 %747
      %v750 = vmul.f32 %v739, %v748
      %752 = vrot.lane.b32.xlu0 %v750, 4
      %v753 = vpop.permute.xlu0 %752
      %v755 = vadd.f32 %v745, %v753
      %v756 = vtanh.pop %v755
      %758 = vrot.lane.b32.xlu0 %v756, 8
      %v759 = vpop.permute.xlu0 %758
      %v761 = vmul.f32 %v739, %v759
      %763 = vrot.lane.b32.xlu0 %v761, 120
      %v764 = vpop.permute.xlu0 %763
      %vm766 = vcmask 61476
      %767 = vst.msk [vmem:[%s326] sm:$0x10] %vm766, %v764
      %768 = vset.pattern.permute.xlu0 12
      %769 = vperm.xlu0 %768, %v761
      %v770 = vpop.permute.xlu0 %769
      %v772 = vrot.slane %v419, 4
      %v774 = vmul.f32 %v770, %v772
      %775 = vset.pattern.permute.xlu0 13
      %776 = vperm.xlu0 %775, %v761
      %v777 = vpop.permute.xlu0 %776
      %v779 = vmul.f32 %v777, %v709
      %v780 = vadd.f32 %v774, %v779
      %781 = vset.pattern.permute.xlu0 14
      %782 = vperm.xlu0 %781, %v761
      %v783 = vpop.permute.xlu0 %782
      %v785 = vmul.f32 %v783, %v646
      %786 = vset.pattern.permute.xlu0 15
      %787 = vperm.xlu0 %786, %v761
      %v788 = vpop.permute.xlu0 %787
      %v790 = vmul.f32 %v788, %v583
      %v791 = vadd.f32 %v785, %v790
      %v792 = vadd.f32 %v780, %v791
      %v794 = vrot.slane %v792, 7
      %v796 = vadd.f32 %v411, %v794
      %v797 = vxor.u32 %v796, 2147483648
      %v798 = vmul.f32 %v797, 1.442695
      %v799 = vpow.pop %v798
      %v800 = vadd.f32 %v799, 1.0
      %v801 = vrcp.pop %v800
      %v802 = vmul.f32 1.0, %v801
      %v803 = vmul.f32 %v802, 2.0
      %v804 = vsub.f32 %v803, 1.0
      %v806 = vrot.slane %v755, 7
      %v808 = vmul.f32 %v802, %v806
      %810 = vrot.lane.b32.xlu0 %v804, 120
      %v811 = vpop.permute.xlu0 %810
      %v813 = vmul.f32 %v802, %v811
      %815 = vrot.lane.b32.xlu0 %v813, 4
      %v816 = vpop.permute.xlu0 %815
      %v818 = vadd.f32 %v808, %v816
      %v819 = vtanh.pop %v818
      %821 = vrot.lane.b32.xlu0 %v819, 8
      %v822 = vpop.permute.xlu0 %821
      %v824 = vmul.f32 %v802, %v822
      %826 = vrot.lane.b32.xlu0 %v824, 120
      %v827 = vpop.permute.xlu0 %826
      %vm829 = vcmask 62501
      %830 = vst.msk [vmem:[%s326] sm:$0x20] %vm829, %v827
      %831 = vset.pattern.permute.xlu0 12
      %832 = vperm.xlu0 %831, %v824
      %v833 = vpop.permute.xlu0 %832
      %v835 = vmul.f32 %v833, %v536
      %836 = vset.pattern.permute.xlu0 13
      %837 = vperm.xlu0 %836, %v824
      %v838 = vpop.permute.xlu0 %837
      %v840 = vmul.f32 %v838, %v772
      %v841 = vadd.f32 %v835, %v840
      %842 = vset.pattern.permute.xlu0 14
      %843 = vperm.xlu0 %842, %v824
      %v844 = vpop.permute.xlu0 %843
      %v846 = vmul.f32 %v844, %v709
      %847 = vset.pattern.permute.xlu0 15
      %848 = vperm.xlu0 %847, %v824
      %v849 = vpop.permute.xlu0 %848
      %v851 = vmul.f32 %v849, %v646
      %v852 = vadd.f32 %v846, %v851
      %v853 = vadd.f32 %v841, %v852
      %v855 = vrot.slane %v853, 7
      %v857 = vadd.f32 %v411, %v855
      %v858 = vxor.u32 %v857, 2147483648
      %v859 = vmul.f32 %v858, 1.442695
      %v860 = vpow.pop %v859
      %v861 = vadd.f32 %v860, 1.0
      %v862 = vrcp.pop %v861
      %v863 = vmul.f32 1.0, %v862
      %v864 = vmul.f32 %v863, 2.0
      %v865 = vsub.f32 %v864, 1.0
      %v867 = vrot.slane %v818, 7
      %v869 = vmul.f32 %v863, %v867
      %871 = vrot.lane.b32.xlu0 %v865, 120
      %v872 = vpop.permute.xlu0 %871
      %v874 = vmul.f32 %v863, %v872
      %876 = vrot.lane.b32.xlu0 %v874, 4
      %v877 = vpop.permute.xlu0 %876
      %v879 = vadd.f32 %v869, %v877
      %v880 = vtanh.pop %v879
      %882 = vrot.lane.b32.xlu0 %v880, 8
      %v883 = vpop.permute.xlu0 %882
      %v885 = vmul.f32 %v863, %v883
      %887 = vrot.lane.b32.xlu0 %v885, 120
      %v888 = vpop.permute.xlu0 %887
      %vm890 = vcmask 63526
      %891 = vst.msk [vmem:[%s326] sm:$0x40] %vm890, %v888
      %892 = vset.pattern.permute.xlu0 12
      %893 = vperm.xlu0 %892, %v885
      %v894 = vpop.permute.xlu0 %893
      %v896 = vmul.f32 %v894, %v529
      %897 = vset.pattern.permute.xlu0 13
      %898 = vperm.xlu0 %897, %v885
      %v899 = vpop.permute.xlu0 %898
      %v901 = vmul.f32 %v899, %v536
      %v902 = vadd.f32 %v896, %v901
      %903 = vset.pattern.permute.xlu0 14
      %904 = vperm.xlu0 %903, %v885
      %v905 = vpop.permute.xlu0 %904
      %v907 = vmul.f32 %v905, %v772
      %908 = vset.pattern.permute.xlu0 15
      %909 = vperm.xlu0 %908, %v885
      %v910 = vpop.permute.xlu0 %909
      %v912 = vmul.f32 %v910, %v709
      %v913 = vadd.f32 %v907, %v912
      %v914 = vadd.f32 %v902, %v913
      %v916 = vrot.slane %v914, 7
      %v918 = vadd.f32 %v411, %v916
      %v919 = vxor.u32 %v918, 2147483648
      %v920 = vmul.f32 %v919, 1.442695
      %v921 = vpow.pop %v920
      %v922 = vadd.f32 %v921, 1.0
      %v923 = vrcp.pop %v922
      %v924 = vmul.f32 1.0, %v923
      %v925 = vmul.f32 %v924, 2.0
      %v926 = vsub.f32 %v925, 1.0
      %v928 = vrot.slane %v879, 7
      %v930 = vmul.f32 %v924, %v928
      %932 = vrot.lane.b32.xlu0 %v926, 120
      %v933 = vpop.permute.xlu0 %932
      %v935 = vmul.f32 %v924, %v933
      %937 = vrot.lane.b32.xlu0 %v935, 4
      %v938 = vpop.permute.xlu0 %937
      %v940 = vadd.f32 %v930, %v938
      %v941 = vtanh.pop %v940
      %943 = vrot.lane.b32.xlu0 %v941, 8
      %v944 = vpop.permute.xlu0 %943
      %v946 = vmul.f32 %v924, %v944
      %948 = vrot.lane.b32.xlu0 %v946, 120
      %v949 = vpop.permute.xlu0 %948
      %vm951 = vcmask 64551
      %952 = vst.msk [vmem:[%s326] sm:$0x80] %vm951, %v949
      %953 = vset.pattern.permute.xlu0 12
      %954 = vperm.xlu0 %953, %v946
      %v955 = vpop.permute.xlu0 %954
      %v957 = vmul.f32 %v955, %v521
      %958 = vset.pattern.permute.xlu0 13
      %959 = vperm.xlu0 %958, %v946
      %v960 = vpop.permute.xlu0 %959
      %v962 = vmul.f32 %v960, %v529
      %v963 = vadd.f32 %v957, %v962
      %964 = vset.pattern.permute.xlu0 14
      %965 = vperm.xlu0 %964, %v946
      %v966 = vpop.permute.xlu0 %965
      %v968 = vmul.f32 %v966, %v536
      %969 = vset.pattern.permute.xlu0 15
      %970 = vperm.xlu0 %969, %v946
      %v971 = vpop.permute.xlu0 %970
      %v973 = vmul.f32 %v971, %v772
      %v974 = vadd.f32 %v968, %v973
      %v975 = vadd.f32 %v963, %v974
      %v977 = vrot.slane %v975, 7
      %v979 = vadd.f32 %v416, %v977
      %v980 = vxor.u32 %v979, 2147483648
      %v981 = vmul.f32 %v980, 1.442695
      %v982 = vpow.pop %v981
      %v983 = vadd.f32 %v982, 1.0
      %v984 = vrcp.pop %v983
      %v985 = vmul.f32 1.0, %v984
      %v986 = vmul.f32 %v985, 2.0
      %v987 = vsub.f32 %v986, 1.0
      %v989 = vrot.slane %v940, 7
      %v991 = vmul.f32 %v985, %v989
      %993 = vrot.lane.b32.xlu0 %v987, 120
      %v994 = vpop.permute.xlu0 %993
      %v996 = vmul.f32 %v985, %v994
      %998 = vrot.lane.b32.xlu0 %v996, 4
      %v999 = vpop.permute.xlu0 %998
      %v1001 = vadd.f32 %v991, %v999
      %v1002 = vtanh.pop %v1001
      %1004 = vrot.lane.b32.xlu0 %v1002, 8
      %v1005 = vpop.permute.xlu0 %1004
      %v1007 = vmul.f32 %v985, %v1005
      %1009 = vrot.lane.b32.xlu0 %v1007, 120
      %v1010 = vpop.permute.xlu0 %1009
      %1012 = vst.msk [vmem:[%s326 + $0x8] sm:$0x1] %vm509, %v1010
      %1013 = vset.pattern.permute.xlu0 12
      %1014 = vperm.xlu0 %1013, %v1007
      %v1015 = vpop.permute.xlu0 %1014
      %v1017 = vmul.f32 %v1015, %v419
      %1018 = vset.pattern.permute.xlu0 13
      %1019 = vperm.xlu0 %1018, %v1007
      %v1020 = vpop.permute.xlu0 %1019
      %v1022 = vmul.f32 %v1020, %v521
      %v1023 = vadd.f32 %v1017, %v1022
      %1024 = vset.pattern.permute.xlu0 14
      %1025 = vperm.xlu0 %1024, %v1007
      %v1026 = vpop.permute.xlu0 %1025
      %v1028 = vmul.f32 %v1026, %v529
      %1029 = vset.pattern.permute.xlu0 15
      %1030 = vperm.xlu0 %1029, %v1007
      %v1031 = vpop.permute.xlu0 %1030
      %v1033 = vmul.f32 %v1031, %v536
      %v1034 = vadd.f32 %v1028, %v1033
      %v1035 = vadd.f32 %v1023, %v1034
      %v1037 = vrot.slane %v1035, 7
      %v1039 = vadd.f32 %v416, %v1037
      %v1040 = vxor.u32 %v1039, 2147483648
      %v1041 = vmul.f32 %v1040, 1.442695
      %v1042 = vpow.pop %v1041
      %v1043 = vadd.f32 %v1042, 1.0
      %v1044 = vrcp.pop %v1043
      %v1045 = vmul.f32 1.0, %v1044
      %v1046 = vmul.f32 %v1045, 2.0
      %v1047 = vsub.f32 %v1046, 1.0
      %v1049 = vrot.slane %v1001, 7
      %v1051 = vmul.f32 %v1045, %v1049
      %1053 = vrot.lane.b32.xlu0 %v1047, 120
      %v1054 = vpop.permute.xlu0 %1053
      %v1056 = vmul.f32 %v1045, %v1054
      %1058 = vrot.lane.b32.xlu0 %v1056, 4
      %v1059 = vpop.permute.xlu0 %1058
      %v1061 = vadd.f32 %v1051, %v1059
      %v1062 = vtanh.pop %v1061
      %1064 = vrot.lane.b32.xlu0 %v1062, 8
      %v1065 = vpop.permute.xlu0 %1064
      %v1067 = vmul.f32 %v1045, %v1065
      %1069 = vrot.lane.b32.xlu0 %v1067, 120
      %v1070 = vpop.permute.xlu0 %1069
      %1072 = vst.msk [vmem:[%s326 + $0x8] sm:$0x2] %vm577, %v1070
      %v1073 = vld [vmem:[%s326] sm:$0xff]
      %v1074 = vld [vmem:[%s326 + $0x8] sm:$0x3]
      %v1075 = vld [vmem:[%s321] sm:$0xff]
      %v1076 = vld [vmem:[%s321 + $0x8] sm:$0x3]
      %1079 = vrot.lane.b32.xlu0 %v1073, 124
      %v1080 = vpop.permute.xlu0 %1079
      %1081 = vrot.lane.b32.xlu0 %v1074, 124
      %v1082 = vpop.permute.xlu0 %1081
      %vm1083 = vcmask 31744
      %v1084 = vsel %vm1083, %v1080, 0
      %v1086 = vsel %vm1083, %v1082, 0
      %v1089 = vsel %vm1083, %v1075, 0
      %v1092 = vsel %vm1083, %v1076, 0
      %1094 = vmatprep.subr.mxu0 0.0
      %1095 = vmatpush1.xpose.msra.mxu0 0.0
      %1096 = vmatprep.subr.mxu0 0.0
      %1097 = vmatpush1.xpose.msra.mxu0 0.0
      %1098 = vmatprep.subr.mxu0 0.0
      %1099 = vmatpush1.xpose.msra.mxu0 0.0
      %1100 = vmatprep.subr.mxu0 0.0
      %1101 = vmatpush1.xpose.msra.mxu0 0.0
      %1102 = vmatprep.subr.mxu0 0.0
      %1103 = vmatpush1.xpose.msra.mxu0 0.0
      %1104 = vmatprep.subr.mxu0 0.0
      %1105 = vmatpush1.xpose.msra.mxu0 0.0
      %1106 = vmatprep.subr.mxu0 0.0
      %1107 = vmatpush1.xpose.msra.mxu0 0.0
      %1108 = vmatprep.subr.mxu0 0.0
      %1109 = vmatpush1.xpose.msra.mxu0 0.0
      %1110 = vmatprep.subr.mxu0 0.0
      %1111 = vmatpush1.xpose.msra.mxu0 0.0
      %1112 = vmatprep.subr.mxu0 0.0
      %1113 = vmatpush1.xpose.msra.mxu0 0.0
      %1114 = vmatprep.subr.mxu0 0.0
      %1115 = vmatpush1.xpose.msra.mxu0 0.0
      %1116 = vmatprep.subr.mxu0 0.0
      %1117 = vmatpush1.xpose.msra.mxu0 0.0
      %1118 = vmatprep.subr.mxu0 0.0
      %1119 = vmatpush1.xpose.msra.mxu0 0.0
      %1120 = vmatprep.subr.mxu0 0.0
      %1121 = vmatpush1.xpose.msra.mxu0 0.0
      %1122 = vmatprep.subr.mxu0 0.0
      %1123 = vmatpush1.xpose.msra.mxu0 %v1092
      %1124 = vmatprep.subr.mxu0 0.0
      %1125 = vmatpush1.xpose.msra.mxu0 %v1089
      %1126 = vmatprep.subr.mxu0 0.0
      %1127 = vmatpush2.xpose.msra.mxu0 0.0
      %1128 = vmatprep.subr.mxu0 0.0
      %1129 = vmatpush2.xpose.msra.mxu0 0.0
      %1130 = vmatprep.subr.mxu0 0.0
      %1131 = vmatpush2.xpose.msra.mxu0 0.0
      %1132 = vmatprep.subr.mxu0 0.0
      %1133 = vmatpush2.xpose.msra.mxu0 0.0
      %1134 = vmatprep.subr.mxu0 0.0
      %1135 = vmatpush2.xpose.msra.mxu0 0.0
      %1136 = vmatprep.subr.mxu0 0.0
      %1137 = vmatpush2.xpose.msra.mxu0 0.0
      %1138 = vmatprep.subr.mxu0 0.0
      %1139 = vmatpush2.xpose.msra.mxu0 0.0
      %1140 = vmatprep.subr.mxu0 0.0
      %1141 = vmatpush2.xpose.msra.mxu0 0.0
      %1142 = vmatprep.subr.mxu0 0.0
      %1143 = vmatpush2.xpose.msra.mxu0 0.0
      %1144 = vmatprep.subr.mxu0 0.0
      %1145 = vmatpush2.xpose.msra.mxu0 0.0
      %1146 = vmatprep.subr.mxu0 0.0
      %1147 = vmatpush2.xpose.msra.mxu0 0.0
      %1148 = vmatprep.subr.mxu0 0.0
      %1149 = vmatpush2.xpose.msra.mxu0 0.0
      %1150 = vmatprep.subr.mxu0 0.0
      %1151 = vmatpush2.xpose.msra.mxu0 0.0
      %1152 = vmatprep.subr.mxu0 0.0
      %1153 = vmatpush2.xpose.msra.mxu0 0.0
      %1154 = vmatprep.subr.mxu0 0.0
      %1155 = vmatpush2.xpose.msra.mxu0 0.0
      %1156 = vmatprep.subr.mxu0 0.0
      %1157 = vmatpush2.xpose.msra.mxu0 0.0
      %1158 = vmatprep.mubr.f32.mxu0 0.0
      %1159 = vmatmul.mubr.f32.gmra.mxu0 %v1084
      %v1160 = vpop.f32.mrf.mxu0
      %v1161 = vadd.f32 0.0, %v1160
      %v1162 = vpop.f32.mrf.mxu0
      %1163 = vmatprep.mubr.f32.mxu0 0.0
      %1164 = vmatmul.mubr.f32.gmra.mxu0 %v1086
      %v1165 = vpop.f32.mrf.mxu0
      %v1166 = vadd.f32 0.0, %v1165
      %v1167 = vpop.f32.mrf.mxu0
      %1168 = vdwg.mxu0
      %v1169 = vmul.f32 %v1161, 1.442695
      %v1170 = vpow.pop %v1169
      %v1171 = vmul.f32 %v1166, 1.442695
      %v1172 = vpow.pop %v1171
      %vm1173 = vcmask 80896
      %v1174 = vsel %vm1173, %v1170, 0.0
      %1175 = vadd.xlane.f32.xlu0 %v1174
      %v1176 = vpop.xlane.xlu0 %1175
      %vm1177 = vcmask 74752
      %v1178 = vsel %vm1177, %v1172, 0.0
      %1179 = vadd.xlane.f32.xlu0 %v1178
      %v1180 = vpop.xlane.xlu0 %1179
      %v1181 = vlaneseq
      %v1182 = vand.u32 %v1181, 127
      %vm1183 = vcmp.eq.s32.totalorder %v1182, 9
      %v1184 = vlog2.pop %v1176
      %v1185 = vmul.f32 %v1184, 0.6931472
      %v1186 = vlog2.pop %v1180
      %v1187 = vmul.f32 %v1186, 0.6931472
      %v1188 = vmul.f32 %v1185, 10.0
      %v1189 = vmul.f32 %v1187, 10.0
      %v1190 = vsub.f32 %v1161, %v1188
      %v1191 = vsub.f32 %v1166, %v1189
      %v1192 = vsel %vm1183, %v1190, %v1161
      %v1193 = vsel %vm1183, %v1191, %v1166
      %v1194 = vlaneseq
      %v1195 = vshrl.u32 %v1194, 7
      %v1196 = vadd.s32 %v1195, 8
      %vm1197 = vcmp.le.s32.totalorder %v1182, %v1195
      %vm1198 = vcmp.le.s32.totalorder %v1182, %v1196
      %v1199 = vsel %vm1197, 1, 0
      %v1200 = vsel %vm1198, 1, 0
      %v1201 = vcvt.s32.f32 %v1199
      %v1202 = vcvt.s32.f32 %v1200
      %v1204 = vsel %vm1173, %v1201, 0
      %v1207 = vsel %vm1173, %v1202, 0
      %vm1209 = vcmask 1041408
      %v1211 = vsel %vm1209, %v1193, 0
      %1213 = vmatprep.subr.mxu0 0.0
      %1214 = vmatpush1.msra.mxu0 0.0
      %1215 = vmatprep.subr.mxu0 0.0
      %1216 = vmatpush1.msra.mxu0 0.0
      %1217 = vmatprep.subr.mxu0 0.0
      %1218 = vmatpush1.msra.mxu0 0.0
      %1219 = vmatprep.subr.mxu0 0.0
      %1220 = vmatpush1.msra.mxu0 0.0
      %1221 = vmatprep.subr.mxu0 0.0
      %1222 = vmatpush1.msra.mxu0 0.0
      %1223 = vmatprep.subr.mxu0 0.0
      %1224 = vmatpush1.msra.mxu0 0.0
      %1225 = vmatprep.subr.mxu0 0.0
      %1226 = vmatpush1.msra.mxu0 0.0
      %1227 = vmatprep.subr.mxu0 0.0
      %1228 = vmatpush1.msra.mxu0 0.0
      %1229 = vmatprep.subr.mxu0 0.0
      %1230 = vmatpush1.msra.mxu0 0.0
      %1231 = vmatprep.subr.mxu0 0.0
      %1232 = vmatpush1.msra.mxu0 0.0
      %1233 = vmatprep.subr.mxu0 0.0
      %1234 = vmatpush1.msra.mxu0 0.0
      %1235 = vmatprep.subr.mxu0 0.0
      %1236 = vmatpush1.msra.mxu0 0.0
      %1237 = vmatprep.subr.mxu0 0.0
      %1238 = vmatpush1.msra.mxu0 0.0
      %1239 = vmatprep.subr.mxu0 0.0
      %1240 = vmatpush1.msra.mxu0 0.0
      %1241 = vmatprep.subr.mxu0 0.0
      %1242 = vmatpush1.msra.mxu0 %v1211
      %1243 = vmatprep.subr.mxu0 0.0
      %1244 = vmatpush1.msra.mxu0 %v1192
      %1245 = vmatprep.subr.mxu0 0.0
      %1246 = vmatpush2.msra.mxu0 0.0
      %1247 = vmatprep.subr.mxu0 0.0
      %1248 = vmatpush2.msra.mxu0 0.0
      %1249 = vmatprep.subr.mxu0 0.0
      %1250 = vmatpush2.msra.mxu0 0.0
      %1251 = vmatprep.subr.mxu0 0.0
      %1252 = vmatpush2.msra.mxu0 0.0
      %1253 = vmatprep.subr.mxu0 0.0
      %1254 = vmatpush2.msra.mxu0 0.0
      %1255 = vmatprep.subr.mxu0 0.0
      %1256 = vmatpush2.msra.mxu0 0.0
      %1257 = vmatprep.subr.mxu0 0.0
      %1258 = vmatpush2.msra.mxu0 0.0
      %1259 = vmatprep.subr.mxu0 0.0
      %1260 = vmatpush2.msra.mxu0 0.0
      %1261 = vmatprep.subr.mxu0 0.0
      %1262 = vmatpush2.msra.mxu0 0.0
      %1263 = vmatprep.subr.mxu0 0.0
      %1264 = vmatpush2.msra.mxu0 0.0
      %1265 = vmatprep.subr.mxu0 0.0
      %1266 = vmatpush2.msra.mxu0 0.0
      %1267 = vmatprep.subr.mxu0 0.0
      %1268 = vmatpush2.msra.mxu0 0.0
      %1269 = vmatprep.subr.mxu0 0.0
      %1270 = vmatpush2.msra.mxu0 0.0
      %1271 = vmatprep.subr.mxu0 0.0
      %1272 = vmatpush2.msra.mxu0 0.0
      %1273 = vmatprep.subr.mxu0 0.0
      %1274 = vmatpush2.msra.mxu0 0.0
      %1275 = vmatprep.subr.mxu0 0.0
      %1276 = vmatpush2.msra.mxu0 0.0
      %1277 = vmatprep.mubr.f32.mxu0 0.0
      %1278 = vmatmul.mubr.f32.gmra.mxu0 %v1204
      %v1279 = vpop.f32.mrf.mxu0
      %v1280 = vadd.f32 0.0, %v1279
      %v1281 = vpop.f32.mrf.mxu0
      %1282 = vmatprep.mubr.f32.mxu0 0.0
      %1283 = vmatmul.mubr.f32.gmra.mxu0 %v1207
      %v1284 = vpop.f32.mrf.mxu0
      %v1285 = vadd.f32 0.0, %v1284
      %v1286 = vpop.f32.mrf.mxu0
      %1287 = vdwg.mxu0
      %v1288 = vmul.f32 %v1280, 1.442695
      %v1289 = vpow.pop %v1288
      %v1290 = vmul.f32 %v1285, 1.442695
      %v1291 = vpow.pop %v1290
      %v1293 = vsel %vm1173, %v1289, 0
      %v1296 = vsel %vm1173, %v1291, 0
      %v1298 = vsel %vm1209, %v1076, 0
      %1300 = vmatprep.subr.mxu0 0.0
      %1301 = vmatpush1.msra.mxu0 0.0
      %1302 = vmatprep.subr.mxu0 0.0
      %1303 = vmatpush1.msra.mxu0 0.0
      %1304 = vmatprep.subr.mxu0 0.0
      %1305 = vmatpush1.msra.mxu0 0.0
      %1306 = vmatprep.subr.mxu0 0.0
      %1307 = vmatpush1.msra.mxu0 0.0
      %1308 = vmatprep.subr.mxu0 0.0
      %1309 = vmatpush1.msra.mxu0 0.0
      %1310 = vmatprep.subr.mxu0 0.0
      %1311 = vmatpush1.msra.mxu0 0.0
      %1312 = vmatprep.subr.mxu0 0.0
      %1313 = vmatpush1.msra.mxu0 0.0
      %1314 = vmatprep.subr.mxu0 0.0
      %1315 = vmatpush1.msra.mxu0 0.0
      %1316 = vmatprep.subr.mxu0 0.0
      %1317 = vmatpush1.msra.mxu0 0.0
      %1318 = vmatprep.subr.mxu0 0.0
      %1319 = vmatpush1.msra.mxu0 0.0
      %1320 = vmatprep.subr.mxu0 0.0
      %1321 = vmatpush1.msra.mxu0 0.0
      %1322 = vmatprep.subr.mxu0 0.0
      %1323 = vmatpush1.msra.mxu0 0.0
      %1324 = vmatprep.subr.mxu0 0.0
      %1325 = vmatpush1.msra.mxu0 0.0
      %1326 = vmatprep.subr.mxu0 0.0
      %1327 = vmatpush1.msra.mxu0 0.0
      %1328 = vmatprep.subr.mxu0 0.0
      %1329 = vmatpush1.msra.mxu0 %v1298
      %1330 = vmatprep.subr.mxu0 0.0
      %1331 = vmatpush1.msra.mxu0 %v1075
      %1332 = vmatprep.subr.mxu0 0.0
      %1333 = vmatpush2.msra.mxu0 0.0
      %1334 = vmatprep.subr.mxu0 0.0
      %1335 = vmatpush2.msra.mxu0 0.0
      %1336 = vmatprep.subr.mxu0 0.0
      %1337 = vmatpush2.msra.mxu0 0.0
      %1338 = vmatprep.subr.mxu0 0.0
      %1339 = vmatpush2.msra.mxu0 0.0
      %1340 = vmatprep.subr.mxu0 0.0
      %1341 = vmatpush2.msra.mxu0 0.0
      %1342 = vmatprep.subr.mxu0 0.0
      %1343 = vmatpush2.msra.mxu0 0.0
      %1344 = vmatprep.subr.mxu0 0.0
      %1345 = vmatpush2.msra.mxu0 0.0
      %1346 = vmatprep.subr.mxu0 0.0
      %1347 = vmatpush2.msra.mxu0 0.0
      %1348 = vmatprep.subr.mxu0 0.0
      %1349 = vmatpush2.msra.mxu0 0.0
      %1350 = vmatprep.subr.mxu0 0.0
      %1351 = vmatpush2.msra.mxu0 0.0
      %1352 = vmatprep.subr.mxu0 0.0
      %1353 = vmatpush2.msra.mxu0 0.0
      %1354 = vmatprep.subr.mxu0 0.0
      %1355 = vmatpush2.msra.mxu0 0.0
      %1356 = vmatprep.subr.mxu0 0.0
      %1357 = vmatpush2.msra.mxu0 0.0
      %1358 = vmatprep.subr.mxu0 0.0
      %1359 = vmatpush2.msra.mxu0 0.0
      %1360 = vmatprep.subr.mxu0 0.0
      %1361 = vmatpush2.msra.mxu0 0.0
      %1362 = vmatprep.subr.mxu0 0.0
      %1363 = vmatpush2.msra.mxu0 0.0
      %1364 = vmatprep.mubr.f32.mxu0 0.0
      %1365 = vmatmul.mubr.f32.gmra.mxu0 %v1293
      %v1366 = vpop.f32.mrf.mxu0
      %v1367 = vadd.f32 0.0, %v1366
      %v1368 = vpop.f32.mrf.mxu0
      %1369 = vmatprep.mubr.f32.mxu0 0.0
      %1370 = vmatmul.mubr.f32.gmra.mxu0 %v1296
      %v1371 = vpop.f32.mrf.mxu0
      %v1372 = vadd.f32 0.0, %v1371
      %v1373 = vpop.f32.mrf.mxu0
      %1374 = vdwg.mxu0
      %1375 = vst.msk [vmem:[%s326] sm:$0xff] %vm1083, %v1367
      %vm1376 = vcmask 25600
      %1377 = vst.msk [vmem:[%s326 + $0x8] sm:$0x3] %vm1376, %v1372
      %p1378 = scmp.lt.s32.totalorder %s18, 1
      %s1379 = scalar_select %p1378, %s18, 1
      %s1380 = smul.addr %s1379, 2
      %s1381 = smul.addr %s1380, 8
      %s1382 = scalar_lea.vmem %s7, %s1381
      // Predicated region
      $region49: #{attention_forward.1} parent=47 // pred_check
        %p1383 = pneg %p203
      $region50: #{attention_forward.1} parent=47 // pred_check_branch
        %1385 = sbr.rel (%p1383) target = $region52
      $region51: #{attention_forward.1} parent=47 // pred_region
        _
      $region52: #{attention_forward.1} parent=47 // pred_fallthru
        _
    $region48: #{attention_forward.1} parent=5 // pred_fallthru
      _
    %p1386 = scmp.le.s32.totalorder 2, %s13
    // Predicated region
    $region53: #{attention_forward.1} parent=5 // pred_check
      %p1387 = pneg %p1386
    $region54: #{attention_forward.1} parent=5 // pred_check_branch
      %1389 = sbr.rel (%p1387) target = $region56
    $region55: #{attention_forward.1} parent=5 // pred_region
      %s1390 = ssub.s32 %s13, 2
      // Predicated region
      $region57: #{attention_forward.1} parent=55 // pred_check
        %p1391 = pneg %p209
      $region58: #{attention_forward.1} parent=55 // pred_check_branch
        %1393 = sbr.rel (%p1391) target = $region60
      $region59: #{attention_forward.1} parent=55 // pred_region
        %p1394 = scmp.lt.s32.totalorder %s19, 1
        %s1395 = scalar_select %p1394, %s19, 1
        %s1396 = smul.addr %s1395, 2
        %s1397 = smul.addr %s1396, 8
        %s1398 = scalar_lea.vmem %s7, %s1397
      $region60: #{attention_forward.1} parent=55 // pred_fallthru
        _
    $region56: #{attention_forward.1} parent=5 // pred_fallthru
      _
  $region6: #{attention_forward.1} parent=0 // loop_footer
    %s17 = sadd.s32 1, %s13
  $region7: #{attention_forward.1} parent=0 // loop_footer_branch
    %12 = sbr.rel target = $region3
  $region8: #{attention_forward.1} parent=0 // loop_exit
    _

</llo_original>
